<compile_context>
chip_gen: v7x
topology: tpu7x:2x2x1
jax: 0.10.0
libtpu: 0.0.40
codegen_flags: <defaults>
</compile_context>

<pallas_src>
import jax
import jax.numpy as jnp
from jax.experimental import pallas as pl
from jax.experimental.pallas import tpu as pltpu


_MASK_VALUE = -1000000.0  # same constant as masked_softmax in the reference


def _round_up(x, m):
    return ((x + m - 1) // m) * m


def _pad_to(x, shape):
    pads = tuple((0, t - s) for s, t in zip(x.shape, shape))
    if all(p == (0, 0) for p in pads):
        return x
    return jnp.pad(x, pads)


def _tpu_defaults():
    """(default compute dtype, VMEM capacity in bytes) for the local TPU."""
    compute_dtype = jnp.float32
    vmem_cap = 64 * 1024 * 1024          # conservative default (v7x per-TC)
    kind = ""
    try:
        kind = jax.devices()[0].device_kind.lower()
    except Exception:
        pass
    # v6e / v7x have bf16 VPU + EUP; keep f32 on v5e and older.
    if any(t in kind for t in ("v6", "v7", "7x")):
        compute_dtype = jnp.bfloat16
    # v4 / v5 / v6 have 128 MiB of VMEM per TensorCore; v7x has 64 MiB.
    if any(t in kind for t in ("v4", "v5", "v6")):
        vmem_cap = 128 * 1024 * 1024
    if any(t in kind for t in ("v2", "v3")):
        vmem_cap = 16 * 1024 * 1024
    try:
        cap = getattr(pltpu.get_tpu_info(), "vmem_capacity_bytes", None)
        if cap and 8 * 1024 * 1024 <= int(cap) <= 1024 * 1024 * 1024:
            vmem_cap = int(cap)
    except Exception:
        pass
    return compute_dtype, vmem_cap


def _additive_attention_kernel(
    vlen_sref,   # SMEM (B,) int32            -- scalar-prefetched valid_lens
    vlen_ref,    # VMEM (Bt, 1, 1) int32
    qp_ref,      # VMEM (Bt, Qt, H_p, 1)      -- query projection, H on sublanes
    kpt_ref,     # VMEM (Bt, H_p, Kt)         -- key projection, transposed
    wv_ref,      # VMEM (1, 1, H_p, 1) f32    -- w_v
    v_ref,       # VMEM (Bt, Kt, Dv_p)
    out_ref,     # VMEM (Bt, Qt, Dv_p)
    m_sc,        # VMEM (Bt, Qt, 1) f32       -- running max
    l_sc,        # VMEM (Bt, Qt, 1) f32       -- running denominator
    acc_sc,      # VMEM (Bt, Qt, Dv_p) f32    -- running numerator
):
    b = pl.program_id(0)
    kv = pl.program_id(2)
    Bt = vlen_ref.shape[0]
    Kt = v_ref.shape[1]

    @pl.when(kv == 0)
    def _init():
        m_sc[...] = jnp.full_like(m_sc, -jnp.inf)
        l_sc[...] = jnp.zeros_like(l_sc)
        acc_sc[...] = jnp.zeros_like(acc_sc)

    # Largest valid length among the Bt batch rows of this tile (SMEM scalars).
    max_len = vlen_sref[b * Bt]
    for i in range(1, Bt):
        max_len = jnp.maximum(max_len, vlen_sref[b * Bt + i])

    # Skip K tiles that are entirely masked (their softmax weight is an exact
    # 0 after the online rescale); tile 0 always runs so rows stay finite.
    @pl.when((kv == 0) | (kv * Kt < max_len))
    def _compute():
        # feat[b,q,h,k] = tanh(q'[b,q,h] + k'[b,h,k]); H on sublanes, keys on
        # lanes -> tanh/VPU work is exactly Bt*Qt*H_p*Kt (no 128-lane padding).
        feat = jnp.tanh(qp_ref[...] + kpt_ref[...][:, None, :, :])
        # scores[b,q,k] = sum_h w_v[h] * feat[b,q,h,k]; wv is f32 so the
        # sublane reduction accumulates in f32 without an extra cast pass.
        scores = jnp.sum(feat * wv_ref[...], axis=-2)                # (Bt,Qt,Kt)

        # Mask keys at or past valid_lens (reference masked_softmax semantics).
        key_ids = jax.lax.broadcasted_iota(jnp.int32, (1, 1, Kt), 2) + kv * Kt
        scores = jnp.where(key_ids >= vlen_ref[...], _MASK_VALUE, scores)

        # Flash-style online softmax across K tiles.
        m_prev = m_sc[...]
        m_new = jnp.maximum(m_prev, jnp.max(scores, axis=-1, keepdims=True))
        alpha = jnp.exp(m_prev - m_new)
        p = jnp.exp(scores - m_new)
        l_sc[...] = alpha * l_sc[...] + jnp.sum(p, axis=-1, keepdims=True)
        acc_sc[...] = alpha * acc_sc[...] + jnp.einsum(
            'bqk,bkv->bqv', p.astype(v_ref.dtype), v_ref[...],
            preferred_element_type=jnp.float32)
        m_sc[...] = m_new

    @pl.when(kv == pl.num_programs(2) - 1)
    def _finalize():
        inv_l = pl.reciprocal(l_sc[...], approx=True)
        out_ref[...] = (acc_sc[...] * inv_l).astype(out_ref.dtype)


def additive_attention(queries, keys, values, valid_lens, W_q, W_k, w_v, *,
                       block_b=None, block_q=None, block_k=None,
                       compute_dtype=None):
    """Pallas AdditiveAttention forward (eval mode).

    compute_dtype=None auto-selects bf16 on v6e/v7x and f32 on v5e and older.
    Pass jnp.float32 explicitly for strict parity with the f32 reference.
    """
    B, Q, _ = queries.shape
    _, K, _ = keys.shape
    _, _, Dv = values.shape
    H = W_q.shape[0]
    out_dtype = queries.dtype

    auto_dtype, vmem_cap = _tpu_defaults()
    if compute_dtype is None:
        compute_dtype = auto_dtype
    cs = jnp.dtype(compute_dtype).itemsize
    os_ = jnp.dtype(out_dtype).itemsize

    H_p = _round_up(H, 16)       # sublane axis of feat: only 8/16-padding needed
    Dv_p = _round_up(Dv, 128)    # lane-dense p@V matmul and output stores

    # ---- tile selection: keys-on-lanes first (Kt multiple of 128, 256 if the
    # budget allows), then fit Bt/Qt to the generation's VMEM budget. ----
    Kt = block_k if block_k is not None else min(_round_up(K, 128), 256)
    Qt = block_q if block_q is not None else min(_round_up(Q, 16), 256)
    if block_b is not None:
        Bt = block_b
    else:
        Bt = 1
        if Qt < 128:  # few queries: pack several batch rows per grid step
            max_bt = max(1, 128 // Qt)
            Bt = max(d for d in range(1, min(B, max_bt) + 1) if B % d == 0)

    budget = int(vmem_cap * 0.4)

    def _vmem_est(bt, qt, kt):
        n_feat = bt * qt * H_p * kt
        return (n_feat * (3 * cs + 4)            # feat chain temps + f32 product
                + 2 * bt * qt * H_p * 128 * cs   # q' block (lane-padded, 2 bufs)
                + 2 * bt * H_p * kt * cs         # k'^T block (2 bufs)
                + 2 * bt * kt * Dv_p * cs        # values block (2 bufs)
                + bt * qt * Dv_p * 4             # f32 accumulator
                + 2 * bt * qt * Dv_p * os_      # output block (2 bufs)
                + 4 * bt * qt * kt * 4)          # scores / p temporaries (f32)

    if block_q is None:
        while _vmem_est(Bt, Qt, Kt) > budget and Qt > 16:
            Qt = max(16, _round_up(Qt // 2, 16))
    if block_b is None:
        while _vmem_est(Bt, Qt, Kt) > budget and Bt > 1:
            Bt = max(d for d in range(1, Bt) if B % d == 0)
    if block_k is None:
        while _vmem_est(Bt, Qt, Kt) > budget and Kt > 128:
            Kt -= 128

    # v7x shards the parallel grid axes over 2 TensorCores: keep the parallel
    # extent >= 2 whenever there is work to split (free on v5e/v6e).
    if block_b is None and block_q is None:
        if (B // Bt) * pl.cdiv(_round_up(Q, 16), Qt) < 2:
            if Bt > 1:
                Bt = max(d for d in range(1, Bt) if B % d == 0)
            elif Qt > 16:
                Qt = max(16, _round_up(Qt // 2, 16))

    Q_p = _round_up(Q, Qt)
    K_p = _round_up(K, Kt)

    # ---- projections hoisted out of the kernel (done once by XLA instead of
    # once per query tile), stored directly in the kernel compute dtype. ----
    f32 = jnp.float32
    qp = jnp.einsum('bqd,hd->bqh', queries.astype(f32), W_q.astype(f32))
    kpt = jnp.einsum('bkd,hd->bhk', keys.astype(f32), W_k.astype(f32))

    qp4 = _pad_to(qp, (B, Q_p, H_p)).astype(compute_dtype).reshape(B, Q_p, H_p, 1)
    kpt_p = _pad_to(kpt, (B, H_p, K_p)).astype(compute_dtype)
    v_p = _pad_to(values, (B, K_p, Dv_p)).astype(compute_dtype)
    wv4 = _pad_to(w_v.astype(f32).reshape(1, -1), (1, H_p)).reshape(1, 1, H_p, 1)
    vlen_i32 = valid_lens.astype(jnp.int32).reshape(B)
    vlen3 = vlen_i32.reshape(B, 1, 1)

    grid = (B // Bt, Q_p // Qt, K_p // Kt)

    grid_spec = pltpu.PrefetchScalarGridSpec(
        num_scalar_prefetch=1,
        grid=grid,
        in_specs=[
            pl.BlockSpec((Bt, 1, 1), lambda b, q, kv, vl: (b, 0, 0)),          # lens
            pl.BlockSpec((Bt, Qt, H_p, 1), lambda b, q, kv, vl: (b, q, 0, 0)),  # q'
            pl.BlockSpec((Bt, H_p, Kt), lambda b, q, kv, vl: (b, 0, kv)),      # k'^T
            pl.BlockSpec((1, 1, H_p, 1), lambda b, q, kv, vl: (0, 0, 0, 0)),   # w_v
            pl.BlockSpec((Bt, Kt, Dv_p), lambda b, q, kv, vl: (b, kv, 0)),     # values
        ],
        out_specs=pl.BlockSpec((Bt, Qt, Dv_p), lambda b, q, kv, vl: (b, q, 0)),
        scratch_shapes=[
            pltpu.VMEM((Bt, Qt, 1), jnp.float32),      # running max
            pltpu.VMEM((Bt, Qt, 1), jnp.float32),      # running denominator
            pltpu.VMEM((Bt, Qt, Dv_p), jnp.float32),   # output accumulator
        ],
    )

    out_p = pl.pallas_call(
        _additive_attention_kernel,
        out_shape=jax.ShapeDtypeStruct((B, Q_p, Dv_p), out_dtype),
        grid_spec=grid_spec,
        compiler_params=pltpu.CompilerParams(
            dimension_semantics=("parallel", "parallel", "arbitrary"),
            vmem_limit_bytes=int(vmem_cap * 3 // 4),
        ),
    )(vlen_i32, vlen3, qp4, kpt_p, wv4, v_p)

    return out_p[:, :Q, :Dv]


def _reference(queries, keys, values, valid_lens, W_q, W_k, w_v):
    """Pure-JAX mirror of the PyTorch module (eval mode)."""
    qp = jnp.einsum('bqd,hd->bqh', queries, W_q)
    kp = jnp.einsum('bkd,hd->bkh', keys, W_k)
    feat = jnp.tanh(qp[:, :, None, :] + kp[:, None, :, :])
    scores = jnp.einsum('bqkh,h->bqk', feat, w_v.reshape(-1))
    _, _, Kn = scores.shape
    key_ids = jnp.arange(Kn)[None, None, :]
    mask = key_ids >= valid_lens[:, None, None]
    scores = jnp.where(mask, _MASK_VALUE, scores)
    w = jax.nn.softmax(scores, axis=-1)
    return jnp.einsum('bqk,bkv->bqv', w, values)


if __name__ == "__main__":
    # Small shapes consistent with the module's forward contract.
    B, Q, K = 2, 4, 8          # batch, num_queries, num_keys
    Dq, Dk, Dv = 16, 16, 32    # query / key / value feature dims
    H = 32                     # num_hidden_units

    key = jax.random.PRNGKey(0)
    kq, kk, kv_, kwq, kwk, kwv = jax.random.split(key, 6)

    queries = jax.random.normal(kq, (B, Q, Dq), dtype=jnp.float32)
    keys = jax.random.normal(kk, (B, K, Dk), dtype=jnp.float32)
    values = jax.random.normal(kv_, (B, K, Dv), dtype=jnp.float32)
    valid_lens = jnp.array([5, 8], dtype=jnp.int32)

    # Deterministic parameter init (nn.Linear-style uniform fan-in bound).
    W_q = jax.random.uniform(kwq, (H, Dq), minval=-1.0 / Dq**0.5, maxval=1.0 / Dq**0.5)
    W_k = jax.random.uniform(kwk, (H, Dk), minval=-1.0 / Dk**0.5, maxval=1.0 / Dk**0.5)
    w_v = jax.random.uniform(kwv, (1, H), minval=-1.0 / H**0.5, maxval=1.0 / H**0.5)

    ref = _reference(queries, keys, values, valid_lens, W_q, W_k, w_v)

    # 1) Default path: compute dtype auto-selected per TPU generation.
    auto_dtype, _ = _tpu_defaults()
    out = additive_attention(queries, keys, values, valid_lens, W_q, W_k, w_v,
                             compute_dtype=auto_dtype)
    out = jax.block_until_ready(out)
    assert out.shape == (B, Q, Dv), out.shape
    tol = 2e-3 if auto_dtype == jnp.float32 else 7.5e-2
    err = float(jnp.max(jnp.abs(out - ref)))
    assert jnp.allclose(out, ref, atol=tol, rtol=tol), err

    # 2) Strict-parity f32 path (independent of chip generation).
    out32 = additive_attention(queries, keys, values, valid_lens, W_q, W_k, w_v,
                               compute_dtype=jnp.float32)
    out32 = jax.block_until_ready(out32)
    err32 = float(jnp.max(jnp.abs(out32 - ref)))
    assert jnp.allclose(out32, ref, atol=2e-3, rtol=2e-3), err32

    print("KERNEL_OK")
</pallas_src>

<mosaic_0001>
module attributes {stable_mosaic.version = 11 : i64} {
  func.func @_additive_attention_kernel(%arg0: i32, %arg1: i32, %arg2: i32, %arg3: memref<2xi32, #tpu.memory_space<smem>>, %arg4: memref<1x1x1xi32, #tpu.memory_space<vmem>>, %arg5: memref<1x16x32x1xf32, #tpu.memory_space<vmem>>, %arg6: memref<1x32x128xf32, #tpu.memory_space<vmem>>, %arg7: memref<1x1x32x1xf32, #tpu.memory_space<vmem>>, %arg8: memref<1x128x128xf32, #tpu.memory_space<vmem>>, %arg9: memref<1x16x128xf32, #tpu.memory_space<vmem>>, %arg10: memref<1x16x1xf32, #tpu.memory_space<vmem>>, %arg11: memref<1x16x1xf32, #tpu.memory_space<vmem>>, %arg12: memref<1x16x128xf32, #tpu.memory_space<vmem>>) attributes {dimension_semantics = [#tpu.dimension_semantics<parallel>, #tpu.dimension_semantics<parallel>, #tpu.dimension_semantics<arbitrary>], iteration_bounds = array<i64: 2, 1, 1>, scalar_prefetch = 1 : i64, scratch_operands = 3 : i64, tpu.core_type = #tpu.core_type<tc>, window_params = [{transform_indices = @transform_0, window_bounds = array<i64: 1, 1, 1>}, {transform_indices = @transform_1, window_bounds = array<i64: 1, 16, 32, 1>}, {transform_indices = @transform_2, window_bounds = array<i64: 1, 32, 128>}, {pipeline_mode = #tpu.pipeline_mode<synchronous>, transform_indices = @transform_3, window_bounds = array<i64: 1, 1, 32, 1>}, {transform_indices = @transform_4, window_bounds = array<i64: 1, 128, 128>}, {transform_indices = @transform_5, window_bounds = array<i64: 1, 16, 128>}]} {
    %c0_i32 = arith.constant 0 : i32
    %0 = arith.cmpi eq, %arg2, %c0_i32 : i32
    %1 = arith.extui %0 : i1 to i32
    %c0_i32_0 = arith.constant 0 : i32
    %2 = arith.cmpi ne, %1, %c0_i32_0 : i32
    scf.if %2 {
      %cst = arith.constant 0xFF800000 : f32
      %15 = vector.broadcast %cst : f32 to vector<1x16x1xf32>
      %c0 = arith.constant 0 : index
      %c0_5 = arith.constant 0 : index
      %c0_6 = arith.constant 0 : index
      %16 = vector.load %arg10[%c0, %c0_5, %c0_6] : memref<1x16x1xf32, #tpu.memory_space<vmem>>, vector<1x16x1xf32>
      tpu.vector_store %arg10[%c0, %c0_5, %c0_6], %15 {strides = array<i32>} : memref<1x16x1xf32, #tpu.memory_space<vmem>>, vector<1x16x1xf32>,
      %cst_7 = arith.constant 0.000000e+00 : f32
      %17 = vector.broadcast %cst_7 : f32 to vector<1x16x1xf32>
      %c0_8 = arith.constant 0 : index
      %c0_9 = arith.constant 0 : index
      %c0_10 = arith.constant 0 : index
      %18 = vector.load %arg11[%c0_8, %c0_9, %c0_10] : memref<1x16x1xf32, #tpu.memory_space<vmem>>, vector<1x16x1xf32>
      tpu.vector_store %arg11[%c0_8, %c0_9, %c0_10], %17 {strides = array<i32>} : memref<1x16x1xf32, #tpu.memory_space<vmem>>, vector<1x16x1xf32>,
      %cst_11 = arith.constant 0.000000e+00 : f32
      %19 = vector.broadcast %cst_11 : f32 to vector<1x16x128xf32>
      %c0_12 = arith.constant 0 : index
      %c0_13 = arith.constant 0 : index
      %c0_14 = arith.constant 0 : index
      %20 = vector.load %arg12[%c0_12, %c0_13, %c0_14] : memref<1x16x128xf32, #tpu.memory_space<vmem>>, vector<1x16x128xf32>
      tpu.vector_store %arg12[%c0_12, %c0_13, %c0_14], %19 {strides = array<i32>} : memref<1x16x128xf32, #tpu.memory_space<vmem>>, vector<1x16x128xf32>,
    } else {
    }
    %c1_i32 = arith.constant 1 : i32
    %3 = arith.muli %arg0, %c1_i32 : i32
    %4 = arith.index_cast %3 : i32 to index
    %5 = memref.load %arg3[%4] : memref<2xi32, #tpu.memory_space<smem>>
    %c0_i32_1 = arith.constant 0 : i32
    %6 = arith.cmpi eq, %arg2, %c0_i32_1 : i32
    %c128_i32 = arith.constant 128 : i32
    %7 = arith.muli %arg2, %c128_i32 : i32
    %8 = arith.cmpi slt, %7, %5 : i32
    %9 = arith.ori %6, %8 : i1
    %10 = arith.extui %9 : i1 to i32
    %c0_i32_2 = arith.constant 0 : i32
    %11 = arith.cmpi ne, %10, %c0_i32_2 : i32
    scf.if %11 {
      %c0 = arith.constant 0 : index
      %c0_5 = arith.constant 0 : index
      %c0_6 = arith.constant 0 : index
      %c0_7 = arith.constant 0 : index
      %15 = vector.load %arg5[%c0, %c0_5, %c0_6, %c0_7] : memref<1x16x32x1xf32, #tpu.memory_space<vmem>>, vector<1x16x32x1xf32>
      %c0_8 = arith.constant 0 : index
      %c0_9 = arith.constant 0 : index
      %c0_10 = arith.constant 0 : index
      %16 = vector.load %arg6[%c0_8, %c0_9, %c0_10] : memref<1x32x128xf32, #tpu.memory_space<vmem>>, vector<1x32x128xf32>
      %17 = vector.shape_cast %16 : vector<1x32x128xf32> to vector<1x1x32x128xf32>
      %18 = vector.broadcast %15 : vector<1x16x32x1xf32> to vector<1x16x32x128xf32>
      %19 = vector.broadcast %17 : vector<1x1x32x128xf32> to vector<1x16x32x128xf32>
      %20 = arith.addf %18, %19 : vector<1x16x32x128xf32>
      %21 = math.tanh %20 : vector<1x16x32x128xf32>
      %c0_11 = arith.constant 0 : index
      %c0_12 = arith.constant 0 : index
      %c0_13 = arith.constant 0 : index
      %c0_14 = arith.constant 0 : index
      %22 = vector.load %arg7[%c0_11, %c0_12, %c0_13, %c0_14] : memref<1x1x32x1xf32, #tpu.memory_space<vmem>>, vector<1x1x32x1xf32>
      %23 = vector.broadcast %22 : vector<1x1x32x1xf32> to vector<1x16x32x128xf32>
      %24 = arith.mulf %21, %23 : vector<1x16x32x128xf32>
      %cst = arith.constant dense<0.000000e+00> : vector<1x16x128xf32>
      %25 = vector.multi_reduction <add>, %24, %cst [2] : vector<1x16x32x128xf32> to vector<1x16x128xf32>
      %26 = tpu.iota {dimensions = array<i32: 2>} : vector<1x1x128xi32>
      %c128_i32_15 = arith.constant 128 : i32
      %27 = arith.muli %arg2, %c128_i32_15 : i32
      %28 = vector.broadcast %27 : i32 to vector<1x1x128xi32>
      %29 = arith.addi %26, %28 : vector<1x1x128xi32>
      %c0_16 = arith.constant 0 : index
      %c0_17 = arith.constant 0 : index
      %c0_18 = arith.constant 0 : index
      %30 = vector.load %arg4[%c0_16, %c0_17, %c0_18] : memref<1x1x1xi32, #tpu.memory_space<vmem>>, vector<1x1x1xi32>
      %31 = vector.broadcast %30 : vector<1x1x1xi32> to vector<1x1x128xi32>
      %32 = arith.cmpi sge, %29, %31 : vector<1x1x128xi32>
      %cst_19 = arith.constant -1.000000e+06 : f32
      %33 = vector.shape_cast %32 : vector<1x1x128xi1> to vector<1x1x128xi1>
      %34 = vector.broadcast %33 : vector<1x1x128xi1> to vector<1x16x128xi1>
      %35 = vector.broadcast %cst_19 : f32 to vector<1x16x128xf32>
      %36 = arith.select %34, %35, %25 : vector<1x16x128xi1>, vector<1x16x128xf32>
      %c0_20 = arith.constant 0 : index
      %c0_21 = arith.constant 0 : index
      %c0_22 = arith.constant 0 : index
      %37 = vector.load %arg10[%c0_20, %c0_21, %c0_22] : memref<1x16x1xf32, #tpu.memory_space<vmem>>, vector<1x16x1xf32>
      %cst_23 = arith.constant dense<0xFF800000> : vector<1x16xf32>
      %38 = vector.multi_reduction <maximumf>, %36, %cst_23 [2] : vector<1x16x128xf32> to vector<1x16xf32>
      %39 = vector.shape_cast %38 : vector<1x16xf32> to vector<1x16x1xf32>
      %40 = arith.maximumf %37, %39 : vector<1x16x1xf32>
      %41 = arith.subf %37, %40 : vector<1x16x1xf32>
      %42 = math.exp %41 : vector<1x16x1xf32>
      %43 = vector.broadcast %40 : vector<1x16x1xf32> to vector<1x16x128xf32>
      %44 = arith.subf %36, %43 : vector<1x16x128xf32>
      %45 = math.exp %44 : vector<1x16x128xf32>
      %c0_24 = arith.constant 0 : index
      %c0_25 = arith.constant 0 : index
      %c0_26 = arith.constant 0 : index
      %46 = vector.load %arg11[%c0_24, %c0_25, %c0_26] : memref<1x16x1xf32, #tpu.memory_space<vmem>>, vector<1x16x1xf32>
      %47 = arith.mulf %42, %46 : vector<1x16x1xf32>
      %cst_27 = arith.constant dense<0.000000e+00> : vector<1x16xf32>
      %48 = vector.multi_reduction <add>, %45, %cst_27 [2] : vector<1x16x128xf32> to vector<1x16xf32>
      %49 = vector.shape_cast %48 : vector<1x16xf32> to vector<1x16x1xf32>
      %50 = arith.addf %47, %49 : vector<1x16x1xf32>
      %c0_28 = arith.constant 0 : index
      %c0_29 = arith.constant 0 : index
      %c0_30 = arith.constant 0 : index
      %51 = vector.load %arg11[%c0_28, %c0_29, %c0_30] : memref<1x16x1xf32, #tpu.memory_space<vmem>>, vector<1x16x1xf32>
      tpu.vector_store %arg11[%c0_28, %c0_29, %c0_30], %50 {strides = array<i32>} : memref<1x16x1xf32, #tpu.memory_space<vmem>>, vector<1x16x1xf32>,
      %c0_31 = arith.constant 0 : index
      %c0_32 = arith.constant 0 : index
      %c0_33 = arith.constant 0 : index
      %52 = vector.load %arg12[%c0_31, %c0_32, %c0_33] : memref<1x16x128xf32, #tpu.memory_space<vmem>>, vector<1x16x128xf32>
      %53 = vector.broadcast %42 : vector<1x16x1xf32> to vector<1x16x128xf32>
      %54 = arith.mulf %53, %52 : vector<1x16x128xf32>
      %c0_34 = arith.constant 0 : index
      %c0_35 = arith.constant 0 : index
      %c0_36 = arith.constant 0 : index
      %55 = vector.load %arg8[%c0_34, %c0_35, %c0_36] : memref<1x128x128xf32, #tpu.memory_space<vmem>>, vector<1x128x128xf32>
      "tpu.trace_start"() <{level = 10 : i32, message = "bqk,bkv->bqv"}> : () -> ()
      %cst_37 = arith.constant dense<0.000000e+00> : vector<1x16x128xf32>
      %56 = tpu.matmul %45, %55, %cst_37 {dimension_numbers = #tpu.dot_dimension_numbers<[2], [1], [1], [2], [0, 0, 0, 1, 1, 2], [0], [0]>} : vector<1x16x128xf32>, vector<1x128x128xf32>, vector<1x16x128xf32> -> vector<1x16x128xf32>
      "tpu.trace_stop"() : () -> ()
      %57 = arith.addf %54, %56 : vector<1x16x128xf32>
      %c0_38 = arith.constant 0 : index
      %c0_39 = arith.constant 0 : index
      %c0_40 = arith.constant 0 : index
      %58 = vector.load %arg12[%c0_38, %c0_39, %c0_40] : memref<1x16x128xf32, #tpu.memory_space<vmem>>, vector<1x16x128xf32>
      tpu.vector_store %arg12[%c0_38, %c0_39, %c0_40], %57 {strides = array<i32>} : memref<1x16x128xf32, #tpu.memory_space<vmem>>, vector<1x16x128xf32>,
      %c0_41 = arith.constant 0 : index
      %c0_42 = arith.constant 0 : index
      %c0_43 = arith.constant 0 : index
      %59 = vector.load %arg10[%c0_41, %c0_42, %c0_43] : memref<1x16x1xf32, #tpu.memory_space<vmem>>, vector<1x16x1xf32>
      tpu.vector_store %arg10[%c0_41, %c0_42, %c0_43], %40 {strides = array<i32>} : memref<1x16x1xf32, #tpu.memory_space<vmem>>, vector<1x16x1xf32>,
    } else {
    }
    %c0_i32_3 = arith.constant 0 : i32
    %12 = arith.cmpi eq, %arg2, %c0_i32_3 : i32
    %13 = arith.extui %12 : i1 to i32
    %c0_i32_4 = arith.constant 0 : i32
    %14 = arith.cmpi ne, %13, %c0_i32_4 : i32
    scf.if %14 {
      %c0 = arith.constant 0 : index
      %c0_5 = arith.constant 0 : index
      %c0_6 = arith.constant 0 : index
      %15 = vector.load %arg11[%c0, %c0_5, %c0_6] : memref<1x16x1xf32, #tpu.memory_space<vmem>>, vector<1x16x1xf32>
      %16 = tpu.reciprocal %15 {approx = true} : vector<1x16x1xf32> -> vector<1x16x1xf32>
      %c0_7 = arith.constant 0 : index
      %c0_8 = arith.constant 0 : index
      %c0_9 = arith.constant 0 : index
      %17 = vector.load %arg12[%c0_7, %c0_8, %c0_9] : memref<1x16x128xf32, #tpu.memory_space<vmem>>, vector<1x16x128xf32>
      %18 = vector.broadcast %16 : vector<1x16x1xf32> to vector<1x16x128xf32>
      %19 = arith.mulf %17, %18 : vector<1x16x128xf32>
      %c0_10 = arith.constant 0 : index
      %c0_11 = arith.constant 0 : index
      %c0_12 = arith.constant 0 : index
      %20 = vector.load %arg9[%c0_10, %c0_11, %c0_12] : memref<1x16x128xf32, #tpu.memory_space<vmem>>, vector<1x16x128xf32>
      tpu.vector_store %arg9[%c0_10, %c0_11, %c0_12], %19 {strides = array<i32>} : memref<1x16x128xf32, #tpu.memory_space<vmem>>, vector<1x16x128xf32>,
    } else {
    }
    return
  }
  func.func @transform_0(%arg0: i32, %arg1: i32, %arg2: i32, %arg3: memref<2xi32, #tpu.memory_space<smem>>) -> (i32, i32, i32) {
    %c0_i32 = arith.constant 0 : i32
    %c0_i32_0 = arith.constant 0 : i32
    %c0_i32_1 = arith.constant 0 : i32
    return %arg0, %c0_i32, %c0_i32_0 : i32, i32, i32
  }
  func.func @transform_1(%arg0: i32, %arg1: i32, %arg2: i32, %arg3: memref<2xi32, #tpu.memory_space<smem>>) -> (i32, i32, i32, i32) {
    %c0_i32 = arith.constant 0 : i32
    %c0_i32_0 = arith.constant 0 : i32
    %c0_i32_1 = arith.constant 0 : i32
    return %arg0, %arg1, %c0_i32, %c0_i32_0 : i32, i32, i32, i32
  }
  func.func @transform_2(%arg0: i32, %arg1: i32, %arg2: i32, %arg3: memref<2xi32, #tpu.memory_space<smem>>) -> (i32, i32, i32) {
    %c0_i32 = arith.constant 0 : i32
    %c0_i32_0 = arith.constant 0 : i32
    return %arg0, %c0_i32, %arg2 : i32, i32, i32
  }
  func.func @transform_3(%arg0: i32, %arg1: i32, %arg2: i32, %arg3: memref<2xi32, #tpu.memory_space<smem>>) -> (i32, i32, i32, i32) {
    %c0_i32 = arith.constant 0 : i32
    %c0_i32_0 = arith.constant 0 : i32
    %c0_i32_1 = arith.constant 0 : i32
    %c0_i32_2 = arith.constant 0 : i32
    %c0_i32_3 = arith.constant 0 : i32
    return %c0_i32, %c0_i32_0, %c0_i32_1, %c0_i32_2 : i32, i32, i32, i32
  }
  func.func @transform_4(%arg0: i32, %arg1: i32, %arg2: i32, %arg3: memref<2xi32, #tpu.memory_space<smem>>) -> (i32, i32, i32) {
    %c0_i32 = arith.constant 0 : i32
    %c0_i32_0 = arith.constant 0 : i32
    return %arg0, %arg2, %c0_i32 : i32, i32, i32
  }
  func.func @transform_5(%arg0: i32, %arg1: i32, %arg2: i32, %arg3: memref<2xi32, #tpu.memory_space<smem>>) -> (i32, i32, i32) {
    %c0_i32 = arith.constant 0 : i32
    %c0_i32_0 = arith.constant 0 : i32
    return %arg0, %arg1, %c0_i32 : i32, i32, i32
  }
}

</mosaic_0001>

<llo_original>
// kernel: tpu_custom_call.1
$region0: #{tpu_custom_call.1}
  #allocation0 [shape = 'u32[]', space=smem, size = 0x4, offset = 0x4, fixed_abs, tag = 'smem constant byte address 0x4 - core index']
  #allocation1 [shape = 'u32[144,128]{1,0:T(1,128)}', space=vmem, size = 0x12000, scoped, tag = 'internal scratch']
  #allocation2 [shape = 'f32[1,16,1]{2,1,0:T(8,128)}', space=vmem, size = 0x2000, scoped, tag = 'scratch operand']
  #allocation3 [shape = 'f32[1,16,1]{2,1,0:T(8,128)}', space=vmem, size = 0x2000, scoped, tag = 'scratch operand']
  #allocation4 [shape = 'f32[1,16,128]{2,1,0:T(8,128)}', space=vmem, size = 0x2000, scoped, tag = 'scratch operand']
  #allocation5 [shape = 's32[1]{0}', space=sflag, size = 0x4, scoped, tag = 'scoped memory for tpu_custom_call.1']
  #allocation6 [shape = 'u8[512]{0}', space=smem, size = 0x200, scoped, tag = 'prefetched SMEM operand 0']
  %s0 = inlined_call_operand.vmem [shape: s32[2], index: 0, kind: input, shape index: {}]
  %s1 = inlined_call_operand.vmem [shape: s32[2,1,1], index: 1, kind: input, shape index: {}]
  %s2 = inlined_call_operand.vmem [shape: f32[2,16,32,1], index: 2, kind: input, shape index: {}]
  %s3 = inlined_call_operand.vmem [shape: f32[2,32,128], index: 3, kind: input, shape index: {}]
  %s4 = inlined_call_operand.vmem [shape: f32[1,1,32,1], index: 4, kind: input, shape index: {}]
  %s5 = inlined_call_operand.vmem [shape: f32[2,128,128], index: 5, kind: input, shape index: {}]
  %s6 = inlined_call_operand.hbm [shape: f32[2,16,128], index: 6, kind: output, shape index: {}]
  %s7 = sld [smem:[#allocation0]]
  $region65: #{tpu_custom_call.1} parent=0
    _
  %s9 = ssub.s32 1, %s7
  %s10 = scalar_select 0, %s9, %s7
  %s11 = sshll.u32 %s0, 4
  %s12 = int_to_ptr.vmem [resolvable:$true] %s11
  %14 = dma.vmem_to_smem %s12, 16, [#allocation6], [#allocation5]
  %15 = dma.done [#allocation5], 16
  %16 = sfence
  $region1: #{tpu_custom_call.1} parent=0
    #allocation7 [shape = 'u8[16384]{0}', space=vmem, size = 0x4000, scoped, tag = 'output window, operand 0']
    #allocation8 [shape = 's32[2]{0}', space=sflag, size = 0x8, scoped, tag = 'scoped memory for tpu_custom_call.1']
    %17 = vsyncpa [#allocation8], 0
    %s18 = scalar_lea.sflag [#allocation8], 1
    %19 = vsyncpa %s18, 0
    loop: start=0, step=1, limit=4
    $region2: #{tpu_custom_call.1} parent=1 // loop_pre_header
      _
    $region3: #{tpu_custom_call.1} parent=1 // loop_header
      %s21 = sphi 0, %s25
      %p22 = scmp.ge.s32.totalorder %s21, 4
      %s28 = sphi 0, %s47
      %s29 = sphi 0, %s43
      %s30 = sphi 0, %s39
      %s31 = sphi 0, %s28
      %s32 = sphi 0, %s29
      %s33 = sphi 0, %s30
      %s34 = sphi 0, %s31
      %s35 = sphi 0, %s32
      %s36 = sphi 0, %s33
      %s50 = sphi 0, %s52
      %s53 = sphi 0, %s50
      %s54 = sphi 0, %s53
      %s70 = sphi 0, %s54
      %s78 = sphi 0, %s80
      %s81 = sphi 0, %s78
      %s82 = sphi 0, %s81
      %s98 = sphi 0, %s82
      %s106 = sphi 0, %s108
      %s109 = sphi 0, %s106
      %s110 = sphi 0, %s109
      %s126 = sphi 0, %s110
      %s130 = sphi 0, %s130
      %s132 = sphi 0, %s130
      %s133 = sphi 0, %s132
      %s147 = sphi 0, %s133
      %s155 = sphi 0, %s157
      %s158 = sphi 0, %s155
      %s159 = sphi 0, %s158
      %s175 = sphi 0, %s159
      %s183 = sphi 0, %s185
      %s186 = sphi 0, %s183
      %s187 = sphi 0, %s186
      %s203 = sphi 0, %s187
    $region4: #{tpu_custom_call.1} parent=1 // loop_header_branch
      %24 = sbr.rel (%p22) target = $region8
    $region5: #{tpu_custom_call.1} parent=1 // loop_body
      %s26 = ssub.s32 %s21, 1
      %s27 = ssub.s32 %s21, 2
      %s37 = sadd.s32 1, %s30
      %p38 = scmp.ge.s32.totalorder %s37, 1
      %s39 = scalar_select %p38, 0, %s37
      %s40 = sadd.s32 1, %s29
      %s41 = scalar_select %p38, %s40, %s29
      %p42 = scmp.ge.s32.totalorder %s41, 1
      %s43 = scalar_select %p42, 0, %s41
      %s44 = sadd.s32 1, %s28
      %s45 = scalar_select %p42, %s44, %s28
      %p46 = scmp.ge.s32.totalorder %s45, 2
      %s47 = scalar_select %p46, 0, %s45
      %s48 = ssub.s32 %s28, %s47
      %p49 = scmp.eq.s32.totalorder %s48, 0
      %s51 = sadd.s32 %s50, 1
      %s52 = scalar_select %p49, %s50, %s51
      %p55 = pneg %p49
      %p56 = scmp.eq.s32.totalorder %s21, 1
      %p57 = por %p55, %p56
      %p58 = scmp.ne.s32.totalorder %s50, %s53
      %p59 = scmp.eq.s32.totalorder %s21, 0
      %p60 = por %p58, %p59
      %p61 = scmp.ne.s32.totalorder %s50, %s53
      %p62 = scmp.eq.s32.totalorder %s26, 1
      %p63 = por %p61, %p62
      %p64 = scmp.ne.s32.totalorder %s53, %s54
      %p65 = scmp.eq.s32.totalorder %s26, 0
      %p66 = por %p64, %p65
      %p67 = scmp.ne.s32.totalorder %s53, %s54
      %p68 = scmp.eq.s32.totalorder %s27, 1
      %p69 = por %p67, %p68
      %p71 = scmp.ne.s32.totalorder %s54, %s70
      %p72 = scmp.eq.s32.totalorder %s27, 0
      %p73 = por %p71, %p72
      %s74 = ssub.s32 %s28, %s47
      %s75 = ssub.s32 %s29, %s43
      %s76 = sor.u32 %s74, %s75
      %p77 = scmp.eq.s32.totalorder %s76, 0
      %s79 = sadd.s32 %s78, 1
      %s80 = scalar_select %p77, %s78, %s79
      %p83 = pneg %p77
      %p84 = scmp.eq.s32.totalorder %s21, 1
      %p85 = por %p83, %p84
      %p86 = scmp.ne.s32.totalorder %s78, %s81
      %p87 = scmp.eq.s32.totalorder %s21, 0
      %p88 = por %p86, %p87
      %p89 = scmp.ne.s32.totalorder %s78, %s81
      %p90 = scmp.eq.s32.totalorder %s26, 1
      %p91 = por %p89, %p90
      %p92 = scmp.ne.s32.totalorder %s81, %s82
      %p93 = scmp.eq.s32.totalorder %s26, 0
      %p94 = por %p92, %p93
      %p95 = scmp.ne.s32.totalorder %s81, %s82
      %p96 = scmp.eq.s32.totalorder %s27, 1
      %p97 = por %p95, %p96
      %p99 = scmp.ne.s32.totalorder %s82, %s98
      %p100 = scmp.eq.s32.totalorder %s27, 0
      %p101 = por %p99, %p100
      %s102 = ssub.s32 %s28, %s47
      %s103 = ssub.s32 %s30, %s39
      %s104 = sor.u32 %s102, %s103
      %p105 = scmp.eq.s32.totalorder %s104, 0
      %s107 = sadd.s32 %s106, 1
      %s108 = scalar_select %p105, %s106, %s107
      %p111 = pneg %p105
      %p112 = scmp.eq.s32.totalorder %s21, 1
      %p113 = por %p111, %p112
      %p114 = scmp.ne.s32.totalorder %s106, %s109
      %p115 = scmp.eq.s32.totalorder %s21, 0
      %p116 = por %p114, %p115
      %p117 = scmp.ne.s32.totalorder %s106, %s109
      %p118 = scmp.eq.s32.totalorder %s26, 1
      %p119 = por %p117, %p118
      %p120 = scmp.ne.s32.totalorder %s109, %s110
      %p121 = scmp.eq.s32.totalorder %s26, 0
      %p122 = por %p120, %p121
      %p123 = scmp.ne.s32.totalorder %s109, %s110
      %p124 = scmp.eq.s32.totalorder %s27, 1
      %p125 = por %p123, %p124
      %p127 = scmp.ne.s32.totalorder %s110, %s126
      %p128 = scmp.eq.s32.totalorder %s27, 0
      %p129 = por %p127, %p128
      %s131 = sadd.s32 %s130, 1
      %p134 = scmp.eq.s32.totalorder %s21, 1
      %p135 = scmp.ne.s32.totalorder %s130, %s132
      %p136 = scmp.eq.s32.totalorder %s21, 0
      %p137 = por %p135, %p136
      %p138 = scmp.ne.s32.totalorder %s130, %s132
      %p139 = scmp.eq.s32.totalorder %s26, 1
      %p140 = por %p138, %p139
      %p141 = scmp.ne.s32.totalorder %s132, %s133
      %p142 = scmp.eq.s32.totalorder %s26, 0
      %p143 = por %p141, %p142
      %p144 = scmp.ne.s32.totalorder %s132, %s133
      %p145 = scmp.eq.s32.totalorder %s27, 1
      %p146 = por %p144, %p145
      %p148 = scmp.ne.s32.totalorder %s133, %s147
      %p149 = scmp.eq.s32.totalorder %s27, 0
      %p150 = por %p148, %p149
      %s151 = ssub.s32 %s28, %s47
      %s152 = ssub.s32 %s30, %s39
      %s153 = sor.u32 %s151, %s152
      %p154 = scmp.eq.s32.totalorder %s153, 0
      %s156 = sadd.s32 %s155, 1
      %s157 = scalar_select %p154, %s155, %s156
      %p160 = pneg %p154
      %p161 = scmp.eq.s32.totalorder %s21, 1
      %p162 = por %p160, %p161
      %p163 = scmp.ne.s32.totalorder %s155, %s158
      %p164 = scmp.eq.s32.totalorder %s21, 0
      %p165 = por %p163, %p164
      %p166 = scmp.ne.s32.totalorder %s155, %s158
      %p167 = scmp.eq.s32.totalorder %s26, 1
      %p168 = por %p166, %p167
      %p169 = scmp.ne.s32.totalorder %s158, %s159
      %p170 = scmp.eq.s32.totalorder %s26, 0
      %p171 = por %p169, %p170
      %p172 = scmp.ne.s32.totalorder %s158, %s159
      %p173 = scmp.eq.s32.totalorder %s27, 1
      %p174 = por %p172, %p173
      %p176 = scmp.ne.s32.totalorder %s159, %s175
      %p177 = scmp.eq.s32.totalorder %s27, 0
      %p178 = por %p176, %p177
      %s179 = ssub.s32 %s28, %s47
      %s180 = ssub.s32 %s29, %s43
      %s181 = sor.u32 %s179, %s180
      %p182 = scmp.eq.s32.totalorder %s181, 0
      %s184 = sadd.s32 %s183, 1
      %s185 = scalar_select %p182, %s183, %s184
      %p188 = pneg %p182
      %p189 = scmp.eq.s32.totalorder %s21, 1
      %p190 = por %p188, %p189
      %p191 = scmp.ne.s32.totalorder %s183, %s186
      %p192 = scmp.eq.s32.totalorder %s21, 0
      %p193 = por %p191, %p192
      %p194 = scmp.ne.s32.totalorder %s183, %s186
      %p195 = scmp.eq.s32.totalorder %s26, 1
      %p196 = por %p194, %p195
      %p197 = scmp.ne.s32.totalorder %s186, %s187
      %p198 = scmp.eq.s32.totalorder %s26, 0
      %p199 = por %p197, %p198
      %p200 = scmp.ne.s32.totalorder %s186, %s187
      %p201 = scmp.eq.s32.totalorder %s27, 1
      %p202 = por %p200, %p201
      %p204 = scmp.ne.s32.totalorder %s187, %s203
      %p205 = scmp.eq.s32.totalorder %s27, 0
      %p206 = por %p204, %p205
      %p207 = scmp.le.s32.totalorder 1, %s21
      %p208 = scmp.lt.s32.totalorder %s21, 3
      %p209 = pnand %p207, %p208
      %p210 = pneg %p209
      // Predicated region
      $region9: #{tpu_custom_call.1} parent=5 // pred_check
        _
      $region10: #{tpu_custom_call.1} parent=5 // pred_check_branch
        %212 = sbr.rel (%p209) target = $region12
      $region11: #{tpu_custom_call.1} parent=5 // pred_region
        %s213 = ssub.s32 %s21, 1
        // Predicated region
        $region13: #{tpu_custom_call.1} parent=11 // pred_check
          %p214 = pneg %p143
        $region14: #{tpu_custom_call.1} parent=11 // pred_check_branch
          %216 = sbr.rel (%p214) target = $region16
        $region15: #{tpu_custom_call.1} parent=11 // pred_region
          _
        $region16: #{tpu_custom_call.1} parent=11 // pred_fallthru
          _
      $region12: #{tpu_custom_call.1} parent=5 // pred_fallthru
        _
      %p217 = scmp.lt.s32.totalorder %s21, 2
      // Predicated region
      $region17: #{tpu_custom_call.1} parent=5 // pred_check
        %p218 = pneg %p217
      $region18: #{tpu_custom_call.1} parent=5 // pred_check_branch
        %220 = sbr.rel (%p218) target = $region20
      $region19: #{tpu_custom_call.1} parent=5 // pred_region
        // Predicated region
        $region21: #{tpu_custom_call.1} parent=19 // pred_check
          %p221 = pneg %p60
        $region22: #{tpu_custom_call.1} parent=19 // pred_check_branch
          %223 = sbr.rel (%p221) target = $region24
        $region23: #{tpu_custom_call.1} parent=19 // pred_region
          %p224 = scmp.lt.s32.totalorder %s28, 1
          %s225 = scalar_select %p224, %s28, 1
          %s226 = scalar_lea.vmem %s1, %s225
        $region24: #{tpu_custom_call.1} parent=19 // pred_fallthru
          _
        // Predicated region
        $region25: #{tpu_custom_call.1} parent=19 // pred_check
          %p227 = pneg %p88
        $region26: #{tpu_custom_call.1} parent=19 // pred_check_branch
          %229 = sbr.rel (%p227) target = $region28
        $region27: #{tpu_custom_call.1} parent=19 // pred_region
          %s230 = smul.u32 16, %s29
          %p231 = scmp.lt.s32.totalorder %s28, 1
          %s232 = scalar_select %p231, %s28, 1
          %p233 = scmp.lt.s32.totalorder %s230, 15
          %s234 = scalar_select %p233, %s230, 15
          %s235 = smul.addr %s234, 4
          %s236 = smul.addr %s232, 64
          %s237 = sadd.s32 %s235, %s236
          %s238 = smul.addr %s237, 8
          %s239 = scalar_lea.vmem %s2, %s238
          %s240 = smul.u32 16, %s29
        $region28: #{tpu_custom_call.1} parent=19 // pred_fallthru
          _
        // Predicated region
        $region29: #{tpu_custom_call.1} parent=19 // pred_check
          %p241 = pneg %p116
        $region30: #{tpu_custom_call.1} parent=19 // pred_check_branch
          %243 = sbr.rel (%p241) target = $region32
        $region31: #{tpu_custom_call.1} parent=19 // pred_region
          %p244 = scmp.lt.s32.totalorder %s28, 1
          %s245 = scalar_select %p244, %s28, 1
          %p246 = scmp.lt.s32.totalorder %s30, 0
          %s247 = scalar_select %p246, %s30, 0
          %s248 = smul.addr %s245, 4
          %s249 = sadd.s32 %s247, %s248
          %s250 = smul.addr %s249, 8
          %s251 = scalar_lea.vmem %s3, %s250
        $region32: #{tpu_custom_call.1} parent=19 // pred_fallthru
          _
        // Predicated region
        $region33: #{tpu_custom_call.1} parent=19 // pred_check
          %p252 = pneg %p165
        $region34: #{tpu_custom_call.1} parent=19 // pred_check_branch
          %254 = sbr.rel (%p252) target = $region36
        $region35: #{tpu_custom_call.1} parent=19 // pred_region
          %s255 = smul.u32 16, %s30
          %p256 = scmp.lt.s32.totalorder %s28, 1
          %s257 = scalar_select %p256, %s28, 1
          %p258 = scmp.lt.s32.totalorder %s255, 15
          %s259 = scalar_select %p258, %s255, 15
          %s260 = smul.addr %s257, 16
          %s261 = sadd.s32 %s259, %s260
          %s262 = smul.addr %s261, 8
          %s263 = scalar_lea.vmem %s5, %s262
          %s264 = smul.u32 16, %s30
        $region36: #{tpu_custom_call.1} parent=19 // pred_fallthru
          _
      $region20: #{tpu_custom_call.1} parent=5 // pred_fallthru
        _
      %p265 = scmp.le.s32.totalorder 1, %s21
      %p266 = scmp.lt.s32.totalorder %s21, 3
      %p267 = pnand %p265, %p266
      %p268 = pneg %p267
      // Predicated region
      $region37: #{tpu_custom_call.1} parent=5 // pred_check
        _
      $region38: #{tpu_custom_call.1} parent=5 // pred_check_branch
        %270 = sbr.rel (%p267) target = $region40
      $region39: #{tpu_custom_call.1} parent=5 // pred_region
        %s271 = ssub.s32 %s21, 1
        %p272 = scmp.lt.s32.totalorder %s31, 1
        %s273 = scalar_select %p272, %s31, 1
        %s274 = scalar_lea.vmem %s1, %s273
        %p275 = pneg %p66
        %p276 = pneg %p63
        %s277 = smul.u32 16, %s32
        %p278 = scmp.lt.s32.totalorder %s31, 1
        %s279 = scalar_select %p278, %s31, 1
        %p280 = scmp.lt.s32.totalorder %s277, 15
        %s281 = scalar_select %p280, %s277, 15
        %s282 = smul.addr %s281, 4
        %s283 = smul.addr %s279, 64
        %s284 = sadd.s32 %s282, %s283
        %s285 = smul.addr %s284, 8
        %s286 = scalar_lea.vmem %s2, %s285
        %p287 = pneg %p94
        %p288 = pneg %p91
        %p289 = scmp.lt.s32.totalorder %s31, 1
        %s290 = scalar_select %p289, %s31, 1
        %p291 = scmp.lt.s32.totalorder %s33, 0
        %s292 = scalar_select %p291, %s33, 0
        %s293 = smul.addr %s290, 4
        %s294 = sadd.s32 %s292, %s293
        %s295 = smul.addr %s294, 8
        %s296 = scalar_lea.vmem %s3, %s295
        %p297 = pneg %p122
        %p298 = pneg %p119
        %p299 = pneg %p143
        %p300 = pneg %p140
        %s301 = smul.u32 16, %s33
        %p302 = scmp.lt.s32.totalorder %s31, 1
        %s303 = scalar_select %p302, %s31, 1
        %p304 = scmp.lt.s32.totalorder %s301, 15
        %s305 = scalar_select %p304, %s301, 15
        %s306 = smul.addr %s303, 16
        %s307 = sadd.s32 %s305, %s306
        %s308 = smul.addr %s307, 8
        %s309 = scalar_lea.vmem %s5, %s308
        %p310 = pneg %p171
        %p311 = pneg %p168
        %p312 = pneg %p199
        %p313 = pneg %p196
        %s314 = sand.u32 %s186, 1
        %s315 = scalar_lea.sflag [#allocation8], %s314
        %s316 = sand.u32 %s186, 1
        %s317 = smul.addr %s316, 16
        %s318 = scalar_lea.vmem [#allocation7], %s317
        %p319 = scmp.lt.s32.totalorder %s31, 1
        %s320 = scalar_select %p319, %s31, 1
        %s321 = scalar_lea.vmem %s1, %s320
        %s322 = smul.u32 16, %s32
        %p323 = scmp.lt.s32.totalorder %s31, 1
        %s324 = scalar_select %p323, %s31, 1
        %p325 = scmp.lt.s32.totalorder %s322, 15
        %s326 = scalar_select %p325, %s322, 15
        %s327 = smul.addr %s326, 4
        %s328 = smul.addr %s324, 64
        %s329 = sadd.s32 %s327, %s328
        %s330 = smul.addr %s329, 8
        %s331 = scalar_lea.vmem %s2, %s330
        %s332 = smul.u32 16, %s32
        %p333 = scmp.lt.s32.totalorder %s31, 1
        %s334 = scalar_select %p333, %s31, 1
        %p335 = scmp.lt.s32.totalorder %s33, 0
        %s336 = scalar_select %p335, %s33, 0
        %s337 = smul.addr %s334, 4
        %s338 = sadd.s32 %s336, %s337
        %s339 = smul.addr %s338, 8
        %s340 = scalar_lea.vmem %s3, %s339
        %s341 = smul.u32 16, %s33
        %p342 = scmp.lt.s32.totalorder %s31, 1
        %s343 = scalar_select %p342, %s31, 1
        %p344 = scmp.lt.s32.totalorder %s341, 15
        %s345 = scalar_select %p344, %s341, 15
        %s346 = smul.addr %s343, 16
        %s347 = sadd.s32 %s345, %s346
        %s348 = smul.addr %s347, 8
        %s349 = scalar_lea.vmem %s5, %s348
        %s350 = smul.u32 16, %s33
        %s351 = smul.u32 2, %s32
        %p352 = scmp.eq.s32.totalorder %s33, 0
        // Predicated region
        $region41: #{tpu_custom_call.1} parent=39 // pred_check
          %p353 = pneg %p352
        $region42: #{tpu_custom_call.1} parent=39 // pred_check_branch
          %355 = sbr.rel (%p353) target = $region44
        $region43: #{tpu_custom_call.1} parent=39 // pred_region
          %vm356 = vcmask 7168
          %357 = vst.msk [vmem:[#allocation2] sm:$0xff] %vm356, -inf
          %358 = vst.msk [vmem:[#allocation2 + $0x8] sm:$0xff] %vm356, -inf
          %359 = vst.msk [vmem:[#allocation3] sm:$0xff] %vm356, 0.0
          %360 = vst.msk [vmem:[#allocation3 + $0x8] sm:$0xff] %vm356, 0.0
          %361 = vst [vmem:[#allocation4] sm:$0xff] 0.0
          %362 = vst [vmem:[#allocation4 + $0x8] sm:$0xff] 0.0
        $region44: #{tpu_custom_call.1} parent=39 // pred_fallthru
          _
        %s363 = sld [smem:[#allocation6 + %s31]]
        %s364 = smul.u32 %s33, 128
        %p365 = scmp.lt.s32.totalorder %s364, %s363
        %p366 = por %p352, %p365
        // Predicated region
        $region45: #{tpu_custom_call.1} parent=39 // pred_check
          %p367 = pneg %p366
        $region46: #{tpu_custom_call.1} parent=39 // pred_check_branch
          %369 = sbr.rel (%p367) target = $region48
        $region47: #{tpu_custom_call.1} parent=39 // pred_region
          %v370 = vld [vmem:[%s331] sm:$0xff]
          %v371 = vld [vmem:[%s331 + $0x8] sm:$0xff]
          %v372 = vld [vmem:[%s331 + $0x10] sm:$0xff]
          %v373 = vld [vmem:[%s331 + $0x18] sm:$0xff]
          %v374 = vld [vmem:[%s331 + $0x20] sm:$0xff]
          %v375 = vld [vmem:[%s331 + $0x28] sm:$0xff]
          %v376 = vld [vmem:[%s331 + $0x30] sm:$0xff]
          %v377 = vld [vmem:[%s331 + $0x38] sm:$0xff]
          %v378 = vld [vmem:[%s331 + $0x40] sm:$0xff]
          %v379 = vld [vmem:[%s331 + $0x48] sm:$0xff]
          %v380 = vld [vmem:[%s331 + $0x50] sm:$0xff]
          %v381 = vld [vmem:[%s331 + $0x58] sm:$0xff]
          %v382 = vld [vmem:[%s331 + $0x60] sm:$0xff]
          %v383 = vld [vmem:[%s331 + $0x68] sm:$0xff]
          %v384 = vld [vmem:[%s331 + $0x70] sm:$0xff]
          %v385 = vld [vmem:[%s331 + $0x78] sm:$0xff]
          %v386 = vld [vmem:[%s331 + $0x80] sm:$0xff]
          %v387 = vld [vmem:[%s331 + $0x88] sm:$0xff]
          %v388 = vld [vmem:[%s331 + $0x90] sm:$0xff]
          %v389 = vld [vmem:[%s331 + $0x98] sm:$0xff]
          %v390 = vld [vmem:[%s331 + $0xa0] sm:$0xff]
          %v391 = vld [vmem:[%s331 + $0xa8] sm:$0xff]
          %v392 = vld [vmem:[%s331 + $0xb0] sm:$0xff]
          %v393 = vld [vmem:[%s331 + $0xb8] sm:$0xff]
          %v394 = vld [vmem:[%s331 + $0xc0] sm:$0xff]
          %v395 = vld [vmem:[%s331 + $0xc8] sm:$0xff]
          %v396 = vld [vmem:[%s331 + $0xd0] sm:$0xff]
          %v397 = vld [vmem:[%s331 + $0xd8] sm:$0xff]
          %v398 = vld [vmem:[%s331 + $0xe0] sm:$0xff]
          %v399 = vld [vmem:[%s331 + $0xe8] sm:$0xff]
          %v400 = vld [vmem:[%s331 + $0xf0] sm:$0xff]
          %v401 = vld [vmem:[%s331 + $0xf8] sm:$0xff]
          %v402 = vld [vmem:[%s331 + $0x100] sm:$0xff]
          %v403 = vld [vmem:[%s331 + $0x108] sm:$0xff]
          %v404 = vld [vmem:[%s331 + $0x110] sm:$0xff]
          %v405 = vld [vmem:[%s331 + $0x118] sm:$0xff]
          %v406 = vld [vmem:[%s331 + $0x120] sm:$0xff]
          %v407 = vld [vmem:[%s331 + $0x128] sm:$0xff]
          %v408 = vld [vmem:[%s331 + $0x130] sm:$0xff]
          %v409 = vld [vmem:[%s331 + $0x138] sm:$0xff]
          %v410 = vld [vmem:[%s331 + $0x140] sm:$0xff]
          %v411 = vld [vmem:[%s331 + $0x148] sm:$0xff]
          %v412 = vld [vmem:[%s331 + $0x150] sm:$0xff]
          %v413 = vld [vmem:[%s331 + $0x158] sm:$0xff]
          %v414 = vld [vmem:[%s331 + $0x160] sm:$0xff]
          %v415 = vld [vmem:[%s331 + $0x168] sm:$0xff]
          %v416 = vld [vmem:[%s331 + $0x170] sm:$0xff]
          %v417 = vld [vmem:[%s331 + $0x178] sm:$0xff]
          %v418 = vld [vmem:[%s331 + $0x180] sm:$0xff]
          %v419 = vld [vmem:[%s331 + $0x188] sm:$0xff]
          %v420 = vld [vmem:[%s331 + $0x190] sm:$0xff]
          %v421 = vld [vmem:[%s331 + $0x198] sm:$0xff]
          %v422 = vld [vmem:[%s331 + $0x1a0] sm:$0xff]
          %v423 = vld [vmem:[%s331 + $0x1a8] sm:$0xff]
          %v424 = vld [vmem:[%s331 + $0x1b0] sm:$0xff]
          %v425 = vld [vmem:[%s331 + $0x1b8] sm:$0xff]
          %v426 = vld [vmem:[%s331 + $0x1c0] sm:$0xff]
          %v427 = vld [vmem:[%s331 + $0x1c8] sm:$0xff]
          %v428 = vld [vmem:[%s331 + $0x1d0] sm:$0xff]
          %v429 = vld [vmem:[%s331 + $0x1d8] sm:$0xff]
          %v430 = vld [vmem:[%s331 + $0x1e0] sm:$0xff]
          %v431 = vld [vmem:[%s331 + $0x1e8] sm:$0xff]
          %v432 = vld [vmem:[%s331 + $0x1f0] sm:$0xff]
          %v433 = vld [vmem:[%s331 + $0x1f8] sm:$0xff]
          %v434 = vld [vmem:[%s340] sm:$0xff]
          %v435 = vld [vmem:[%s340 + $0x8] sm:$0xff]
          %v436 = vld [vmem:[%s340 + $0x10] sm:$0xff]
          %v437 = vld [vmem:[%s340 + $0x18] sm:$0xff]
          %439 = vset.pattern.permute.xlu0 0
          %440 = vperm.xlu0 %439, %v370
          %v441 = vpop.permute.xlu0 %440
          %444 = vset.pattern.permute.xlu0 0
          %445 = vperm.xlu0 %444, %v371
          %v446 = vpop.permute.xlu0 %445
          %449 = vset.pattern.permute.xlu0 0
          %450 = vperm.xlu0 %449, %v372
          %v451 = vpop.permute.xlu0 %450
          %454 = vset.pattern.permute.xlu0 0
          %455 = vperm.xlu0 %454, %v373
          %v456 = vpop.permute.xlu0 %455
          %459 = vset.pattern.permute.xlu0 0
          %460 = vperm.xlu0 %459, %v374
          %v461 = vpop.permute.xlu0 %460
          %464 = vset.pattern.permute.xlu0 0
          %465 = vperm.xlu0 %464, %v375
          %v466 = vpop.permute.xlu0 %465
          %469 = vset.pattern.permute.xlu0 0
          %470 = vperm.xlu0 %469, %v376
          %v471 = vpop.permute.xlu0 %470
          %474 = vset.pattern.permute.xlu0 0
          %475 = vperm.xlu0 %474, %v377
          %v476 = vpop.permute.xlu0 %475
          %479 = vset.pattern.permute.xlu0 0
          %480 = vperm.xlu0 %479, %v378
          %v481 = vpop.permute.xlu0 %480
          %484 = vset.pattern.permute.xlu0 0
          %485 = vperm.xlu0 %484, %v379
          %v486 = vpop.permute.xlu0 %485
          %489 = vset.pattern.permute.xlu0 0
          %490 = vperm.xlu0 %489, %v380
          %v491 = vpop.permute.xlu0 %490
          %494 = vset.pattern.permute.xlu0 0
          %495 = vperm.xlu0 %494, %v381
          %v496 = vpop.permute.xlu0 %495
          %499 = vset.pattern.permute.xlu0 0
          %500 = vperm.xlu0 %499, %v382
          %v501 = vpop.permute.xlu0 %500
          %504 = vset.pattern.permute.xlu0 0
          %505 = vperm.xlu0 %504, %v383
          %v506 = vpop.permute.xlu0 %505
          %509 = vset.pattern.permute.xlu0 0
          %510 = vperm.xlu0 %509, %v384
          %v511 = vpop.permute.xlu0 %510
          %514 = vset.pattern.permute.xlu0 0
          %515 = vperm.xlu0 %514, %v385
          %v516 = vpop.permute.xlu0 %515
          %519 = vset.pattern.permute.xlu0 0
          %520 = vperm.xlu0 %519, %v386
          %v521 = vpop.permute.xlu0 %520
          %524 = vset.pattern.permute.xlu0 0
          %525 = vperm.xlu0 %524, %v387
          %v526 = vpop.permute.xlu0 %525
          %529 = vset.pattern.permute.xlu0 0
          %530 = vperm.xlu0 %529, %v388
          %v531 = vpop.permute.xlu0 %530
          %534 = vset.pattern.permute.xlu0 0
          %535 = vperm.xlu0 %534, %v389
          %v536 = vpop.permute.xlu0 %535
          %539 = vset.pattern.permute.xlu0 0
          %540 = vperm.xlu0 %539, %v390
          %v541 = vpop.permute.xlu0 %540
          %544 = vset.pattern.permute.xlu0 0
          %545 = vperm.xlu0 %544, %v391
          %v546 = vpop.permute.xlu0 %545
          %549 = vset.pattern.permute.xlu0 0
          %550 = vperm.xlu0 %549, %v392
          %v551 = vpop.permute.xlu0 %550
          %554 = vset.pattern.permute.xlu0 0
          %555 = vperm.xlu0 %554, %v393
          %v556 = vpop.permute.xlu0 %555
          %559 = vset.pattern.permute.xlu0 0
          %560 = vperm.xlu0 %559, %v394
          %v561 = vpop.permute.xlu0 %560
          %564 = vset.pattern.permute.xlu0 0
          %565 = vperm.xlu0 %564, %v395
          %v566 = vpop.permute.xlu0 %565
          %569 = vset.pattern.permute.xlu0 0
          %570 = vperm.xlu0 %569, %v396
          %v571 = vpop.permute.xlu0 %570
          %574 = vset.pattern.permute.xlu0 0
          %575 = vperm.xlu0 %574, %v397
          %v576 = vpop.permute.xlu0 %575
          %579 = vset.pattern.permute.xlu0 0
          %580 = vperm.xlu0 %579, %v398
          %v581 = vpop.permute.xlu0 %580
          %584 = vset.pattern.permute.xlu0 0
          %585 = vperm.xlu0 %584, %v399
          %v586 = vpop.permute.xlu0 %585
          %589 = vset.pattern.permute.xlu0 0
          %590 = vperm.xlu0 %589, %v400
          %v591 = vpop.permute.xlu0 %590
          %594 = vset.pattern.permute.xlu0 0
          %595 = vperm.xlu0 %594, %v401
          %v596 = vpop.permute.xlu0 %595
          %599 = vset.pattern.permute.xlu0 0
          %600 = vperm.xlu0 %599, %v402
          %v601 = vpop.permute.xlu0 %600
          %604 = vset.pattern.permute.xlu0 0
          %605 = vperm.xlu0 %604, %v403
          %v606 = vpop.permute.xlu0 %605
          %609 = vset.pattern.permute.xlu0 0
          %610 = vperm.xlu0 %609, %v404
          %v611 = vpop.permute.xlu0 %610
          %614 = vset.pattern.permute.xlu0 0
          %615 = vperm.xlu0 %614, %v405
          %v616 = vpop.permute.xlu0 %615
          %619 = vset.pattern.permute.xlu0 0
          %620 = vperm.xlu0 %619, %v406
          %v621 = vpop.permute.xlu0 %620
          %624 = vset.pattern.permute.xlu0 0
          %625 = vperm.xlu0 %624, %v407
          %v626 = vpop.permute.xlu0 %625
          %629 = vset.pattern.permute.xlu0 0
          %630 = vperm.xlu0 %629, %v408
          %v631 = vpop.permute.xlu0 %630
          %634 = vset.pattern.permute.xlu0 0
          %635 = vperm.xlu0 %634, %v409
          %v636 = vpop.permute.xlu0 %635
          %639 = vset.pattern.permute.xlu0 0
          %640 = vperm.xlu0 %639, %v410
          %v641 = vpop.permute.xlu0 %640
          %644 = vset.pattern.permute.xlu0 0
          %645 = vperm.xlu0 %644, %v411
          %v646 = vpop.permute.xlu0 %645
          %649 = vset.pattern.permute.xlu0 0
          %650 = vperm.xlu0 %649, %v412
          %v651 = vpop.permute.xlu0 %650
          %654 = vset.pattern.permute.xlu0 0
          %655 = vperm.xlu0 %654, %v413
          %v656 = vpop.permute.xlu0 %655
          %659 = vset.pattern.permute.xlu0 0
          %660 = vperm.xlu0 %659, %v414
          %v661 = vpop.permute.xlu0 %660
          %664 = vset.pattern.permute.xlu0 0
          %665 = vperm.xlu0 %664, %v415
          %v666 = vpop.permute.xlu0 %665
          %669 = vset.pattern.permute.xlu0 0
          %670 = vperm.xlu0 %669, %v416
          %v671 = vpop.permute.xlu0 %670
          %674 = vset.pattern.permute.xlu0 0
          %675 = vperm.xlu0 %674, %v417
          %v676 = vpop.permute.xlu0 %675
          %679 = vset.pattern.permute.xlu0 0
          %680 = vperm.xlu0 %679, %v418
          %v681 = vpop.permute.xlu0 %680
          %684 = vset.pattern.permute.xlu0 0
          %685 = vperm.xlu0 %684, %v419
          %v686 = vpop.permute.xlu0 %685
          %689 = vset.pattern.permute.xlu0 0
          %690 = vperm.xlu0 %689, %v420
          %v691 = vpop.permute.xlu0 %690
          %694 = vset.pattern.permute.xlu0 0
          %695 = vperm.xlu0 %694, %v421
          %v696 = vpop.permute.xlu0 %695
          %699 = vset.pattern.permute.xlu0 0
          %700 = vperm.xlu0 %699, %v422
          %v701 = vpop.permute.xlu0 %700
          %704 = vset.pattern.permute.xlu0 0
          %705 = vperm.xlu0 %704, %v423
          %v706 = vpop.permute.xlu0 %705
          %709 = vset.pattern.permute.xlu0 0
          %710 = vperm.xlu0 %709, %v424
          %v711 = vpop.permute.xlu0 %710
          %714 = vset.pattern.permute.xlu0 0
          %715 = vperm.xlu0 %714, %v425
          %v716 = vpop.permute.xlu0 %715
          %719 = vset.pattern.permute.xlu0 0
          %720 = vperm.xlu0 %719, %v426
          %v721 = vpop.permute.xlu0 %720
          %724 = vset.pattern.permute.xlu0 0
          %725 = vperm.xlu0 %724, %v427
          %v726 = vpop.permute.xlu0 %725
          %729 = vset.pattern.permute.xlu0 0
          %730 = vperm.xlu0 %729, %v428
          %v731 = vpop.permute.xlu0 %730
          %734 = vset.pattern.permute.xlu0 0
          %735 = vperm.xlu0 %734, %v429
          %v736 = vpop.permute.xlu0 %735
          %739 = vset.pattern.permute.xlu0 0
          %740 = vperm.xlu0 %739, %v430
          %v741 = vpop.permute.xlu0 %740
          %744 = vset.pattern.permute.xlu0 0
          %745 = vperm.xlu0 %744, %v431
          %v746 = vpop.permute.xlu0 %745
          %749 = vset.pattern.permute.xlu0 0
          %750 = vperm.xlu0 %749, %v432
          %v751 = vpop.permute.xlu0 %750
          %754 = vset.pattern.permute.xlu0 0
          %755 = vperm.xlu0 %754, %v433
          %v756 = vpop.permute.xlu0 %755
          %v758 = vadd.f32 %v441, %v434
          %v759 = vadd.f32 %v446, %v435
          %v760 = vadd.f32 %v451, %v436
          %v761 = vadd.f32 %v456, %v437
          %v762 = vadd.f32 %v461, %v434
          %v763 = vadd.f32 %v466, %v435
          %v764 = vadd.f32 %v471, %v436
          %v765 = vadd.f32 %v476, %v437
          %v766 = vadd.f32 %v481, %v434
          %v767 = vadd.f32 %v486, %v435
          %v768 = vadd.f32 %v491, %v436
          %v769 = vadd.f32 %v496, %v437
          %v770 = vadd.f32 %v501, %v434
          %v771 = vadd.f32 %v506, %v435
          %v772 = vadd.f32 %v511, %v436
          %v773 = vadd.f32 %v516, %v437
          %v774 = vadd.f32 %v521, %v434
          %v775 = vadd.f32 %v526, %v435
          %v776 = vadd.f32 %v531, %v436
          %v777 = vadd.f32 %v536, %v437
          %v778 = vadd.f32 %v541, %v434
          %v779 = vadd.f32 %v546, %v435
          %v780 = vadd.f32 %v551, %v436
          %v781 = vadd.f32 %v556, %v437
          %v782 = vadd.f32 %v561, %v434
          %v783 = vadd.f32 %v566, %v435
          %v784 = vadd.f32 %v571, %v436
          %v785 = vadd.f32 %v576, %v437
          %v786 = vadd.f32 %v581, %v434
          %v787 = vadd.f32 %v586, %v435
          %v788 = vadd.f32 %v591, %v436
          %v789 = vadd.f32 %v596, %v437
          %v790 = vadd.f32 %v601, %v434
          %v791 = vadd.f32 %v606, %v435
          %v792 = vadd.f32 %v611, %v436
          %v793 = vadd.f32 %v616, %v437
          %v794 = vadd.f32 %v621, %v434
          %v795 = vadd.f32 %v626, %v435
          %v796 = vadd.f32 %v631, %v436
          %v797 = vadd.f32 %v636, %v437
          %v798 = vadd.f32 %v641, %v434
          %v799 = vadd.f32 %v646, %v435
          %v800 = vadd.f32 %v651, %v436
          %v801 = vadd.f32 %v656, %v437
          %v802 = vadd.f32 %v661, %v434
          %v803 = vadd.f32 %v666, %v435
          %v804 = vadd.f32 %v671, %v436
          %v805 = vadd.f32 %v676, %v437
          %v806 = vadd.f32 %v681, %v434
          %v807 = vadd.f32 %v686, %v435
          %v808 = vadd.f32 %v691, %v436
          %v809 = vadd.f32 %v696, %v437
          %v810 = vadd.f32 %v701, %v434
          %v811 = vadd.f32 %v706, %v435
          %v812 = vadd.f32 %v711, %v436
          %v813 = vadd.f32 %v716, %v437
          %v814 = vadd.f32 %v721, %v434
          %v815 = vadd.f32 %v726, %v435
          %v816 = vadd.f32 %v731, %v436
          %v817 = vadd.f32 %v736, %v437
          %v818 = vadd.f32 %v741, %v434
          %v819 = vadd.f32 %v746, %v435
          %v820 = vadd.f32 %v751, %v436
          %v821 = vadd.f32 %v756, %v437
          %v822 = vtanh.pop %v758
          %v823 = vtanh.pop %v759
          %v824 = vtanh.pop %v760
          %v825 = vtanh.pop %v761
          %v826 = vtanh.pop %v762
          %v827 = vtanh.pop %v763
          %v828 = vtanh.pop %v764
          %v829 = vtanh.pop %v765
          %v830 = vtanh.pop %v766
          %v831 = vtanh.pop %v767
          %v832 = vtanh.pop %v768
          %v833 = vtanh.pop %v769
          %v834 = vtanh.pop %v770
          %v835 = vtanh.pop %v771
          %v836 = vtanh.pop %v772
          %v837 = vtanh.pop %v773
          %v838 = vtanh.pop %v774
          %v839 = vtanh.pop %v775
          %v840 = vtanh.pop %v776
          %v841 = vtanh.pop %v777
          %v842 = vtanh.pop %v778
          %v843 = vtanh.pop %v779
          %v844 = vtanh.pop %v780
          %v845 = vtanh.pop %v781
          %v846 = vtanh.pop %v782
          %v847 = vtanh.pop %v783
          %v848 = vtanh.pop %v784
          %v849 = vtanh.pop %v785
          %v850 = vtanh.pop %v786
          %v851 = vtanh.pop %v787
          %v852 = vtanh.pop %v788
          %v853 = vtanh.pop %v789
          %v854 = vtanh.pop %v790
          %v855 = vtanh.pop %v791
          %v856 = vtanh.pop %v792
          %v857 = vtanh.pop %v793
          %v858 = vtanh.pop %v794
          %v859 = vtanh.pop %v795
          %v860 = vtanh.pop %v796
          %v861 = vtanh.pop %v797
          %v862 = vtanh.pop %v798
          %v863 = vtanh.pop %v799
          %v864 = vtanh.pop %v800
          %v865 = vtanh.pop %v801
          %v866 = vtanh.pop %v802
          %v867 = vtanh.pop %v803
          %v868 = vtanh.pop %v804
          %v869 = vtanh.pop %v805
          %v870 = vtanh.pop %v806
          %v871 = vtanh.pop %v807
          %v872 = vtanh.pop %v808
          %v873 = vtanh.pop %v809
          %v874 = vtanh.pop %v810
          %v875 = vtanh.pop %v811
          %v876 = vtanh.pop %v812
          %v877 = vtanh.pop %v813
          %v878 = vtanh.pop %v814
          %v879 = vtanh.pop %v815
          %v880 = vtanh.pop %v816
          %v881 = vtanh.pop %v817
          %v882 = vtanh.pop %v818
          %v883 = vtanh.pop %v819
          %v884 = vtanh.pop %v820
          %v885 = vtanh.pop %v821
          %v886 = vld [vmem:[%s4] sm:$0xff]
          %v887 = vld [vmem:[%s4 + $0x8] sm:$0xff]
          %v888 = vld [vmem:[%s4 + $0x10] sm:$0xff]
          %v889 = vld [vmem:[%s4 + $0x18] sm:$0xff]
          %891 = vset.pattern.permute.xlu0 0
          %892 = vperm.xlu0 %891, %v886
          %v893 = vpop.permute.xlu0 %892
          %896 = vset.pattern.permute.xlu0 0
          %897 = vperm.xlu0 %896, %v887
          %v898 = vpop.permute.xlu0 %897
          %901 = vset.pattern.permute.xlu0 0
          %902 = vperm.xlu0 %901, %v888
          %v903 = vpop.permute.xlu0 %902
          %906 = vset.pattern.permute.xlu0 0
          %907 = vperm.xlu0 %906, %v889
          %v908 = vpop.permute.xlu0 %907
          %v910 = vmul.f32 %v822, %v893
          %v911 = vmul.f32 %v823, %v898
          %v912 = vmul.f32 %v824, %v903
          %v913 = vmul.f32 %v825, %v908
          %v914 = vmul.f32 %v826, %v893
          %v915 = vmul.f32 %v827, %v898
          %v916 = vmul.f32 %v828, %v903
          %v917 = vmul.f32 %v829, %v908
          %v918 = vmul.f32 %v830, %v893
          %v919 = vmul.f32 %v831, %v898
          %v920 = vmul.f32 %v832, %v903
          %v921 = vmul.f32 %v833, %v908
          %v922 = vmul.f32 %v834, %v893
          %v923 = vmul.f32 %v835, %v898
          %v924 = vmul.f32 %v836, %v903
          %v925 = vmul.f32 %v837, %v908
          %v926 = vmul.f32 %v838, %v893
          %v927 = vmul.f32 %v839, %v898
          %v928 = vmul.f32 %v840, %v903
          %v929 = vmul.f32 %v841, %v908
          %v930 = vmul.f32 %v842, %v893
          %v931 = vmul.f32 %v843, %v898
          %v932 = vmul.f32 %v844, %v903
          %v933 = vmul.f32 %v845, %v908
          %v934 = vmul.f32 %v846, %v893
          %v935 = vmul.f32 %v847, %v898
          %v936 = vmul.f32 %v848, %v903
          %v937 = vmul.f32 %v849, %v908
          %v938 = vmul.f32 %v850, %v893
          %v939 = vmul.f32 %v851, %v898
          %v940 = vmul.f32 %v852, %v903
          %v941 = vmul.f32 %v853, %v908
          %v942 = vmul.f32 %v854, %v893
          %v943 = vmul.f32 %v855, %v898
          %v944 = vmul.f32 %v856, %v903
          %v945 = vmul.f32 %v857, %v908
          %v946 = vmul.f32 %v858, %v893
          %v947 = vmul.f32 %v859, %v898
          %v948 = vmul.f32 %v860, %v903
          %v949 = vmul.f32 %v861, %v908
          %v950 = vmul.f32 %v862, %v893
          %v951 = vmul.f32 %v863, %v898
          %v952 = vmul.f32 %v864, %v903
          %v953 = vmul.f32 %v865, %v908
          %v954 = vmul.f32 %v866, %v893
          %v955 = vmul.f32 %v867, %v898
          %v956 = vmul.f32 %v868, %v903
          %v957 = vmul.f32 %v869, %v908
          %v958 = vmul.f32 %v870, %v893
          %v959 = vmul.f32 %v871, %v898
          %v960 = vmul.f32 %v872, %v903
          %v961 = vmul.f32 %v873, %v908
          %v962 = vmul.f32 %v874, %v893
          %v963 = vmul.f32 %v875, %v898
          %v964 = vmul.f32 %v876, %v903
          %v965 = vmul.f32 %v877, %v908
          %v966 = vmul.f32 %v878, %v893
          %v967 = vmul.f32 %v879, %v898
          %v968 = vmul.f32 %v880, %v903
          %v969 = vmul.f32 %v881, %v908
          %v970 = vmul.f32 %v882, %v893
          %v971 = vmul.f32 %v883, %v898
          %v972 = vmul.f32 %v884, %v903
          %v973 = vmul.f32 %v885, %v908
          %v974 = vadd.f32 %v910, %v911
          %v975 = vadd.f32 %v974, %v912
          %v976 = vadd.f32 %v975, %v913
          %v977 = vrot.slane %v976, 4
          %v978 = vadd.f32 %v976, %v977
          %v979 = vrot.slane %v978, 2
          %v980 = vadd.f32 %v978, %v979
          %v981 = vrot.slane %v980, 1
          %v982 = vadd.f32 %v980, %v981
          %v983 = vadd.f32 %v914, %v915
          %v984 = vadd.f32 %v983, %v916
          %v985 = vadd.f32 %v984, %v917
          %v986 = vrot.slane %v985, 4
          %v987 = vadd.f32 %v985, %v986
          %v988 = vrot.slane %v987, 2
          %v989 = vadd.f32 %v987, %v988
          %v990 = vrot.slane %v989, 1
          %v991 = vadd.f32 %v989, %v990
          %v992 = vadd.f32 %v918, %v919
          %v993 = vadd.f32 %v992, %v920
          %v994 = vadd.f32 %v993, %v921
          %v995 = vrot.slane %v994, 4
          %v996 = vadd.f32 %v994, %v995
          %v997 = vrot.slane %v996, 2
          %v998 = vadd.f32 %v996, %v997
          %v999 = vrot.slane %v998, 1
          %v1000 = vadd.f32 %v998, %v999
          %v1001 = vadd.f32 %v922, %v923
          %v1002 = vadd.f32 %v1001, %v924
          %v1003 = vadd.f32 %v1002, %v925
          %v1004 = vrot.slane %v1003, 4
          %v1005 = vadd.f32 %v1003, %v1004
          %v1006 = vrot.slane %v1005, 2
          %v1007 = vadd.f32 %v1005, %v1006
          %v1008 = vrot.slane %v1007, 1
          %v1009 = vadd.f32 %v1007, %v1008
          %v1010 = vadd.f32 %v926, %v927
          %v1011 = vadd.f32 %v1010, %v928
          %v1012 = vadd.f32 %v1011, %v929
          %v1013 = vrot.slane %v1012, 4
          %v1014 = vadd.f32 %v1012, %v1013
          %v1015 = vrot.slane %v1014, 2
          %v1016 = vadd.f32 %v1014, %v1015
          %v1017 = vrot.slane %v1016, 1
          %v1018 = vadd.f32 %v1016, %v1017
          %v1019 = vadd.f32 %v930, %v931
          %v1020 = vadd.f32 %v1019, %v932
          %v1021 = vadd.f32 %v1020, %v933
          %v1022 = vrot.slane %v1021, 4
          %v1023 = vadd.f32 %v1021, %v1022
          %v1024 = vrot.slane %v1023, 2
          %v1025 = vadd.f32 %v1023, %v1024
          %v1026 = vrot.slane %v1025, 1
          %v1027 = vadd.f32 %v1025, %v1026
          %v1028 = vadd.f32 %v934, %v935
          %v1029 = vadd.f32 %v1028, %v936
          %v1030 = vadd.f32 %v1029, %v937
          %v1031 = vrot.slane %v1030, 4
          %v1032 = vadd.f32 %v1030, %v1031
          %v1033 = vrot.slane %v1032, 2
          %v1034 = vadd.f32 %v1032, %v1033
          %v1035 = vrot.slane %v1034, 1
          %v1036 = vadd.f32 %v1034, %v1035
          %v1037 = vadd.f32 %v938, %v939
          %v1038 = vadd.f32 %v1037, %v940
          %v1039 = vadd.f32 %v1038, %v941
          %v1040 = vrot.slane %v1039, 4
          %v1041 = vadd.f32 %v1039, %v1040
          %v1042 = vrot.slane %v1041, 2
          %v1043 = vadd.f32 %v1041, %v1042
          %v1044 = vrot.slane %v1043, 1
          %v1045 = vadd.f32 %v1043, %v1044
          %v1046 = vadd.f32 %v942, %v943
          %v1047 = vadd.f32 %v1046, %v944
          %v1048 = vadd.f32 %v1047, %v945
          %v1049 = vrot.slane %v1048, 4
          %v1050 = vadd.f32 %v1048, %v1049
          %v1051 = vrot.slane %v1050, 2
          %v1052 = vadd.f32 %v1050, %v1051
          %v1053 = vrot.slane %v1052, 1
          %v1054 = vadd.f32 %v1052, %v1053
          %v1055 = vadd.f32 %v946, %v947
          %v1056 = vadd.f32 %v1055, %v948
          %v1057 = vadd.f32 %v1056, %v949
          %v1058 = vrot.slane %v1057, 4
          %v1059 = vadd.f32 %v1057, %v1058
          %v1060 = vrot.slane %v1059, 2
          %v1061 = vadd.f32 %v1059, %v1060
          %v1062 = vrot.slane %v1061, 1
          %v1063 = vadd.f32 %v1061, %v1062
          %v1064 = vadd.f32 %v950, %v951
          %v1065 = vadd.f32 %v1064, %v952
          %v1066 = vadd.f32 %v1065, %v953
          %v1067 = vrot.slane %v1066, 4
          %v1068 = vadd.f32 %v1066, %v1067
          %v1069 = vrot.slane %v1068, 2
          %v1070 = vadd.f32 %v1068, %v1069
          %v1071 = vrot.slane %v1070, 1
          %v1072 = vadd.f32 %v1070, %v1071
          %v1073 = vadd.f32 %v954, %v955
          %v1074 = vadd.f32 %v1073, %v956
          %v1075 = vadd.f32 %v1074, %v957
          %v1076 = vrot.slane %v1075, 4
          %v1077 = vadd.f32 %v1075, %v1076
          %v1078 = vrot.slane %v1077, 2
          %v1079 = vadd.f32 %v1077, %v1078
          %v1080 = vrot.slane %v1079, 1
          %v1081 = vadd.f32 %v1079, %v1080
          %v1082 = vadd.f32 %v958, %v959
          %v1083 = vadd.f32 %v1082, %v960
          %v1084 = vadd.f32 %v1083, %v961
          %v1085 = vrot.slane %v1084, 4
          %v1086 = vadd.f32 %v1084, %v1085
          %v1087 = vrot.slane %v1086, 2
          %v1088 = vadd.f32 %v1086, %v1087
          %v1089 = vrot.slane %v1088, 1
          %v1090 = vadd.f32 %v1088, %v1089
          %v1091 = vadd.f32 %v962, %v963
          %v1092 = vadd.f32 %v1091, %v964
          %v1093 = vadd.f32 %v1092, %v965
          %v1094 = vrot.slane %v1093, 4
          %v1095 = vadd.f32 %v1093, %v1094
          %v1096 = vrot.slane %v1095, 2
          %v1097 = vadd.f32 %v1095, %v1096
          %v1098 = vrot.slane %v1097, 1
          %v1099 = vadd.f32 %v1097, %v1098
          %v1100 = vadd.f32 %v966, %v967
          %v1101 = vadd.f32 %v1100, %v968
          %v1102 = vadd.f32 %v1101, %v969
          %v1103 = vrot.slane %v1102, 4
          %v1104 = vadd.f32 %v1102, %v1103
          %v1105 = vrot.slane %v1104, 2
          %v1106 = vadd.f32 %v1104, %v1105
          %v1107 = vrot.slane %v1106, 1
          %v1108 = vadd.f32 %v1106, %v1107
          %v1109 = vadd.f32 %v970, %v971
          %v1110 = vadd.f32 %v1109, %v972
          %v1111 = vadd.f32 %v1110, %v973
          %v1112 = vrot.slane %v1111, 4
          %v1113 = vadd.f32 %v1111, %v1112
          %v1114 = vrot.slane %v1113, 2
          %v1115 = vadd.f32 %v1113, %v1114
          %v1116 = vrot.slane %v1115, 1
          %v1117 = vadd.f32 %v1115, %v1116
          %v1118 = vlaneseq
          %v1119 = vand.u32 %v1118, 127
          %v1120 = vstv %s364
          %v1121 = vadd.s32 %v1119, %v1120
          %v1122 = vld [vmem:[%s321] sm:$0x1]
          %1123 = vset.pattern.permute.xlu0 0
          %1124 = vperm.xlu0 %1123, %v1122
          %v1125 = vpop.permute.xlu0 %1124
          %v1126 = vlaneseq
          %v1127 = vshrl.u32 %v1126, 7
          %v1128 = vsub.s32 0, %v1127
          %v1129 = vrot.slane %v1125, %v1128
          %vm1130 = vcmp.ge.s32.totalorder %v1121, %v1129
          %v1131 = vsel %vm1130, 1, 0
          %vm1132 = vcmp.eq.s32.totalorder %v1131, 1
          %vm1149 = vcmask 1041409
          %v1150 = vsel %vm1149, %v991, %v982
          %vm1151 = vcmask 1042434
          %v1152 = vsel %vm1151, %v1000, %v1150
          %vm1153 = vcmask 1043459
          %v1154 = vsel %vm1153, %v1009, %v1152
          %vm1155 = vcmask 1044484
          %v1156 = vsel %vm1155, %v1018, %v1154
          %vm1157 = vcmask 1045509
          %v1158 = vsel %vm1157, %v1027, %v1156
          %vm1159 = vcmask 1046534
          %v1160 = vsel %vm1159, %v1036, %v1158
          %vm1161 = vcmask 1047559
          %v1162 = vsel %vm1161, %v1045, %v1160
          %v1163 = vsel %vm1149, %v1063, %v1054
          %v1164 = vsel %vm1151, %v1072, %v1163
          %v1165 = vsel %vm1153, %v1081, %v1164
          %v1166 = vsel %vm1155, %v1090, %v1165
          %v1167 = vsel %vm1157, %v1099, %v1166
          %v1168 = vsel %vm1159, %v1108, %v1167
          %v1169 = vsel %vm1161, %v1117, %v1168
          %v1172 = vsel %vm1132, -1000000.0, %v1162
          %v1173 = vsel %vm1132, -1000000.0, %v1169
          %v1174 = vld [vmem:[#allocation2] sm:$0xff]
          %v1175 = vld [vmem:[#allocation2 + $0x8] sm:$0xff]
          %1176 = vmax.xlane.f32.xlu0 %v1172
          %v1177 = vpop.xlane.xlu0 %1176
          %1178 = vmax.xlane.f32.xlu0 %v1173
          %v1179 = vpop.xlane.xlu0 %1178
          %v1180 = vmax.f32 %v1174, %v1177
          %v1181 = vmax.f32 %v1175, %v1179
          %v1182 = vsub.f32 %v1174, %v1180
          %v1183 = vsub.f32 %v1175, %v1181
          %v1184 = vmul.f32 %v1182, 1.442695
          %v1185 = vpow.pop %v1184
          %v1186 = vmul.f32 %v1183, 1.442695
          %v1187 = vpow.pop %v1186
          %1189 = vset.pattern.permute.xlu0 0
          %1190 = vperm.xlu0 %1189, %v1180
          %v1191 = vpop.permute.xlu0 %1190
          %1194 = vset.pattern.permute.xlu0 0
          %1195 = vperm.xlu0 %1194, %v1181
          %v1196 = vpop.permute.xlu0 %1195
          %v1198 = vsub.f32 %v1172, %v1191
          %v1199 = vsub.f32 %v1173, %v1196
          %v1200 = vmul.f32 %v1198, 1.442695
          %v1201 = vpow.pop %v1200
          %v1202 = vmul.f32 %v1199, 1.442695
          %v1203 = vpow.pop %v1202
          %v1204 = vld [vmem:[#allocation3] sm:$0xff]
          %v1205 = vld [vmem:[#allocation3 + $0x8] sm:$0xff]
          %v1206 = vmul.f32 %v1185, %v1204
          %v1207 = vmul.f32 %v1187, %v1205
          %1208 = vadd.xlane.f32.xlu0 %v1201
          %v1209 = vpop.xlane.xlu0 %1208
          %1210 = vadd.xlane.f32.xlu0 %v1203
          %v1211 = vpop.xlane.xlu0 %1210
          %v1212 = vadd.f32 %v1206, %v1209
          %v1213 = vadd.f32 %v1207, %v1211
          %vm1214 = vcmask 7168
          %1215 = vst.msk [vmem:[#allocation3] sm:$0xff] %vm1214, %v1212
          %1216 = vst.msk [vmem:[#allocation3 + $0x8] sm:$0xff] %vm1214, %v1213
          %v1217 = vld [vmem:[#allocation4] sm:$0xff]
          %v1218 = vld [vmem:[#allocation4 + $0x8] sm:$0xff]
          %1220 = vset.pattern.permute.xlu0 0
          %1221 = vperm.xlu0 %1220, %v1185
          %v1222 = vpop.permute.xlu0 %1221
          %1225 = vset.pattern.permute.xlu0 0
          %1226 = vperm.xlu0 %1225, %v1187
          %v1227 = vpop.permute.xlu0 %1226
          %v1229 = vmul.f32 %v1222, %v1217
          %v1230 = vmul.f32 %v1227, %v1218
          %v1231 = vld [vmem:[%s349] sm:$0xff]
          %v1232 = vld [vmem:[%s349 + $0x8] sm:$0xff]
          %v1233 = vld [vmem:[%s349 + $0x10] sm:$0xff]
          %v1234 = vld [vmem:[%s349 + $0x18] sm:$0xff]
          %v1235 = vld [vmem:[%s349 + $0x20] sm:$0xff]
          %v1236 = vld [vmem:[%s349 + $0x28] sm:$0xff]
          %v1237 = vld [vmem:[%s349 + $0x30] sm:$0xff]
          %v1238 = vld [vmem:[%s349 + $0x38] sm:$0xff]
          %v1239 = vld [vmem:[%s349 + $0x40] sm:$0xff]
          %v1240 = vld [vmem:[%s349 + $0x48] sm:$0xff]
          %v1241 = vld [vmem:[%s349 + $0x50] sm:$0xff]
          %v1242 = vld [vmem:[%s349 + $0x58] sm:$0xff]
          %v1243 = vld [vmem:[%s349 + $0x60] sm:$0xff]
          %v1244 = vld [vmem:[%s349 + $0x68] sm:$0xff]
          %v1245 = vld [vmem:[%s349 + $0x70] sm:$0xff]
          %v1246 = vld [vmem:[%s349 + $0x78] sm:$0xff]
          %1247 = vmatprep.subr.mxu0 0.0
          %1248 = vmatpush1.msra.mxu0 %v1231
          %1249 = vmatprep.subr.mxu0 0.0
          %1250 = vmatpush1.msra.mxu0 %v1232
          %1251 = vmatprep.subr.mxu0 0.0
          %1252 = vmatpush1.msra.mxu0 %v1233
          %1253 = vmatprep.subr.mxu0 0.0
          %1254 = vmatpush1.msra.mxu0 %v1234
          %1255 = vmatprep.subr.mxu0 0.0
          %1256 = vmatpush1.msra.mxu0 %v1235
          %1257 = vmatprep.subr.mxu0 0.0
          %1258 = vmatpush1.msra.mxu0 %v1236
          %1259 = vmatprep.subr.mxu0 0.0
          %1260 = vmatpush1.msra.mxu0 %v1237
          %1261 = vmatprep.subr.mxu0 0.0
          %1262 = vmatpush1.msra.mxu0 %v1238
          %1263 = vmatprep.subr.mxu0 0.0
          %1264 = vmatpush1.msra.mxu0 %v1239
          %1265 = vmatprep.subr.mxu0 0.0
          %1266 = vmatpush1.msra.mxu0 %v1240
          %1267 = vmatprep.subr.mxu0 0.0
          %1268 = vmatpush1.msra.mxu0 %v1241
          %1269 = vmatprep.subr.mxu0 0.0
          %1270 = vmatpush1.msra.mxu0 %v1242
          %1271 = vmatprep.subr.mxu0 0.0
          %1272 = vmatpush1.msra.mxu0 %v1243
          %1273 = vmatprep.subr.mxu0 0.0
          %1274 = vmatpush1.msra.mxu0 %v1244
          %1275 = vmatprep.subr.mxu0 0.0
          %1276 = vmatpush1.msra.mxu0 %v1245
          %1277 = vmatprep.subr.mxu0 0.0
          %1278 = vmatpush1.msra.mxu0 %v1246
          %1279 = vmatprep.subr.mxu0 0.0
          %1280 = vmatpush1.msra.mxu0 0.0
          %1281 = vmatprep.subr.mxu0 0.0
          %1282 = vmatpush1.msra.mxu0 0.0
          %1283 = vmatprep.subr.mxu0 0.0
          %1284 = vmatpush1.msra.mxu0 0.0
          %1285 = vmatprep.subr.mxu0 0.0
          %1286 = vmatpush1.msra.mxu0 0.0
          %1287 = vmatprep.subr.mxu0 0.0
          %1288 = vmatpush1.msra.mxu0 0.0
          %1289 = vmatprep.subr.mxu0 0.0
          %1290 = vmatpush1.msra.mxu0 0.0
          %1291 = vmatprep.subr.mxu0 0.0
          %1292 = vmatpush1.msra.mxu0 0.0
          %1293 = vmatprep.subr.mxu0 0.0
          %1294 = vmatpush1.msra.mxu0 0.0
          %1295 = vmatprep.subr.mxu0 0.0
          %1296 = vmatpush1.msra.mxu0 0.0
          %1297 = vmatprep.subr.mxu0 0.0
          %1298 = vmatpush1.msra.mxu0 0.0
          %1299 = vmatprep.subr.mxu0 0.0
          %1300 = vmatpush1.msra.mxu0 0.0
          %1301 = vmatprep.subr.mxu0 0.0
          %1302 = vmatpush1.msra.mxu0 0.0
          %1303 = vmatprep.subr.mxu0 0.0
          %1304 = vmatpush1.msra.mxu0 0.0
          %1305 = vmatprep.subr.mxu0 0.0
          %1306 = vmatpush1.msra.mxu0 0.0
          %1307 = vmatprep.subr.mxu0 0.0
          %1308 = vmatpush1.msra.mxu0 0.0
          %1309 = vmatprep.subr.mxu0 0.0
          %1310 = vmatpush1.msra.mxu0 0.0
          %1311 = vmatprep.mubr.f32.mxu0 0.0
          %1312 = vmatmul.mubr.f32.gmra.mrb[0].mxu0 %v1201
          %v1313 = vpop.f32.mrb[0].mxu0
          %v1314 = vadd.f32 0.0, %v1313
          %v1315 = vpop.f32.mrb[0].mxu0
          %1316 = vmatprep.mubr.f32.mxu0 0.0
          %1317 = vmatmul.mubr.f32.gmra.mrb[0].mxu0 %v1203
          %v1318 = vpop.f32.mrb[0].mxu0
          %v1319 = vadd.f32 0.0, %v1318
          %v1320 = vpop.f32.mrb[0].mxu0
          %1321 = vdwg.mxu0
          %v1322 = vadd.f32 %v1229, %v1314
          %v1323 = vadd.f32 %v1230, %v1319
          %1324 = vst [vmem:[#allocation4] sm:$0xff] %v1322
          %1325 = vst [vmem:[#allocation4 + $0x8] sm:$0xff] %v1323
          %1326 = vst.msk [vmem:[#allocation2] sm:$0xff] %vm1214, %v1180
          %1327 = vst.msk [vmem:[#allocation2 + $0x8] sm:$0xff] %vm1214, %v1181
        $region48: #{tpu_custom_call.1} parent=39 // pred_fallthru
          _
        // Predicated region
        $region49: #{tpu_custom_call.1} parent=39 // pred_check
          %p1328 = pneg %p352
        $region50: #{tpu_custom_call.1} parent=39 // pred_check_branch
          %1330 = sbr.rel (%p1328) target = $region52
        $region51: #{tpu_custom_call.1} parent=39 // pred_region
          %v1331 = vld [vmem:[#allocation3] sm:$0xff]
          %v1332 = vld [vmem:[#allocation3 + $0x8] sm:$0xff]
          %v1333 = vrcp.pop %v1331
          %v1334 = vrcp.pop %v1332
          %v1335 = vld [vmem:[#allocation4] sm:$0xff]
          %v1336 = vld [vmem:[#allocation4 + $0x8] sm:$0xff]
          %1338 = vset.pattern.permute.xlu0 0
          %1339 = vperm.xlu0 %1338, %v1333
          %v1340 = vpop.permute.xlu0 %1339
          %1343 = vset.pattern.permute.xlu0 0
          %1344 = vperm.xlu0 %1343, %v1334
          %v1345 = vpop.permute.xlu0 %1344
          %v1347 = vmul.f32 %v1335, %v1340
          %v1348 = vmul.f32 %v1336, %v1345
          %1349 = vst [vmem:[%s318] sm:$0xff] %v1347
          %1350 = vst [vmem:[%s318 + $0x8] sm:$0xff] %v1348
        $region52: #{tpu_custom_call.1} parent=39 // pred_fallthru
          _
        %s1351 = sand.u32 %s186, 1
        %s1352 = scalar_lea.sflag [#allocation8], %s1351
        %s1353 = sand.u32 %s186, 1
        %s1354 = smul.addr %s1353, 16
        %s1355 = scalar_lea.vmem [#allocation7], %s1354
        // Predicated region
        $region53: #{tpu_custom_call.1} parent=39 // pred_check
          %p1356 = pneg %p196
        $region54: #{tpu_custom_call.1} parent=39 // pred_check_branch
          %1358 = sbr.rel (%p1356) target = $region56
        $region55: #{tpu_custom_call.1} parent=39 // pred_region
          %s1359 = smul.u32 2, %s32
          %s1361 = ssub.s32 256, 256
          %1362 = vsyncadd %s1352, %s1361
          %s1363 = smul.addr %s31, 2
          %s1364 = sadd.s32 %s1359, %s1363
          %s1365 = smul.addr %s1364, 128
          %s1366 = scalar_lea.hbm %s6, %s1365
          %s1367 = sshll.u32 %s1355, 4
          %s1368 = int_to_ptr.vmem [resolvable:$true] %s1367
          %1373 = dma.vmem_to_hbm [thread:$0]  %s1368, 256, %s1366, %s1352, 128, 128, 8
        $region56: #{tpu_custom_call.1} parent=39 // pred_fallthru
          _
      $region40: #{tpu_custom_call.1} parent=5 // pred_fallthru
        _
      %p1374 = scmp.le.s32.totalorder 2, %s21
      // Predicated region
      $region57: #{tpu_custom_call.1} parent=5 // pred_check
        %p1375 = pneg %p1374
      $region58: #{tpu_custom_call.1} parent=5 // pred_check_branch
        %1377 = sbr.rel (%p1375) target = $region60
      $region59: #{tpu_custom_call.1} parent=5 // pred_region
        %s1378 = ssub.s32 %s21, 2
        // Predicated region
        $region61: #{tpu_custom_call.1} parent=59 // pred_check
          %p1379 = pneg %p202
        $region62: #{tpu_custom_call.1} parent=59 // pred_check_branch
          %1381 = sbr.rel (%p1379) target = $region64
        $region63: #{tpu_custom_call.1} parent=59 // pred_region
          %s1382 = sand.u32 %s187, 1
          %s1383 = scalar_lea.sflag [#allocation8], %s1382
          %s1384 = sand.u32 %s187, 1
          %s1385 = smul.addr %s1384, 16
          %s1386 = scalar_lea.vmem [#allocation7], %s1385
          %1387 = dma.done %s1383, 256
        $region64: #{tpu_custom_call.1} parent=59 // pred_fallthru
          _
      $region60: #{tpu_custom_call.1} parent=5 // pred_fallthru
        _
    $region6: #{tpu_custom_call.1} parent=1 // loop_footer
      %s25 = sadd.s32 1, %s21
    $region7: #{tpu_custom_call.1} parent=1 // loop_footer_branch
      %20 = sbr.rel target = $region3
    $region8: #{tpu_custom_call.1} parent=1 // loop_exit
      _
    %1388 = vsyncpa [#allocation8], 1
    %s1389 = scalar_lea.sflag [#allocation8], 1
    %1390 = vsyncpa %s1389, 1

</llo_original>
